<compile_context>
chip_gen: v7x
topology: tpu7x:2x2x1
jax: 0.10.0
libtpu: 0.0.40
codegen_flags: <defaults>
</compile_context>

<pallas_src>
import functools

import jax
import jax.numpy as jnp
from jax.experimental import pallas as pl
from jax.experimental.pallas import tpu as pltpu


# ----------------------------- model configuration -----------------------------
IN_DIM = 20          # raw state size (multiple of 5, > 5 so preprocess runs)
MID_DIM = 32         # hidden width
OUT_DIM = 6          # numActions
NUM_HIDDEN = 2       # number of hidden blocks
NEW_IN_DIM = 5 + OUT_DIM + (IN_DIM - 5) // 5 * 4   # = 23
LN_EPS = 1e-5        # PyTorch LayerNorm default
LANES = 128

BATCH = 256          # demo batch (amortizes launch; any batch works, padded to tile)
BATCH_TILE = 128     # rows per grid step (multiple of 8)


def _round_up(x, m):
    return (x + m - 1) // m * m


# ---------------------- packed-parameter layout (rows of a (PACK_ROWS, 128) buffer) ----
IN_W_ROW = 0                                           # w_in: rows [0, 23), lanes [0, 32)
IN_B_ROW = NEW_IN_DIM                                  # b_in: row 23
HIDDEN_BASE = _round_up(NEW_IN_DIM + 1, 8)             # 24
HIDDEN_STRIDE = _round_up(MID_DIM + 3, 8)              # 40 (w:32, b:1, gamma:1, beta:1, pad)
HEAD_BASE = HIDDEN_BASE + NUM_HIDDEN * HIDDEN_STRIDE   # 104
HEAD_K = MID_DIM + NEW_IN_DIM                          # 55 (h-path rows then x-hook rows)
HEAD_B_ROW = HEAD_BASE + HEAD_K                        # 159
PACK_ROWS = _round_up(HEAD_B_ROW + 1, 8)               # 160
VALUE_COL = OUT_DIM                                    # lane 6 = value; lanes 0..5 = adv


# ----------------------------- preprocess (plain JAX glue, fused under jit) ------------
def preprocess(state, num_actions):
    """Mirror of PolicyNetDQN.preprocess for 2D input [B, inDim]."""
    b, in_dim = state.shape
    t = in_dim // 5
    action_features = state[:, 4:in_dim - 5:5]                        # (B, T-1)
    action_indices = (action_features * 40.0).astype(jnp.int32)       # trunc toward zero (.long())
    valid_mask = action_indices != -1
    action_indices = jnp.where(action_indices == -1, 0, action_indices)
    one_hots = jax.nn.one_hot(action_indices, num_actions, dtype=state.dtype)  # (B, T-1, A)
    one_hots = one_hots * valid_mask[..., None].astype(state.dtype)
    weights = 1.0 / (jnp.arange(t - 1, 0, -1, dtype=state.dtype) ** 2)          # (T-1,)
    one_hots_summed = (one_hots * weights[None, :, None]).sum(axis=1)           # (B, A)
    current_state = state[:, -5:]                                               # (B, 5)
    hist_minus_actions = state.reshape(b, t, 5)[:, :-1, :-1].reshape(b, -1)     # (B, (T-1)*4)
    return jnp.concatenate([one_hots_summed, hist_minus_actions, current_state], axis=1)


# ----------------------------- Pallas kernel -----------------------------
def dueling_ff_kernel(x_ref, p_ref, o_ref):
    x = x_ref[...]                                                    # (TB, NEW_IN_DIM)

    # h = relu(input(x))
    w_in = p_ref[IN_W_ROW:IN_W_ROW + NEW_IN_DIM, 0:MID_DIM]
    b_in = p_ref[IN_B_ROW:IN_B_ROW + 1, 0:MID_DIM]
    h = jnp.maximum(jnp.dot(x, w_in, preferred_element_type=jnp.float32) + b_in, 0.0)

    # numHidden x (Linear -> LayerNorm -> ReLU), statically unrolled
    for l in range(NUM_HIDDEN):
        off = HIDDEN_BASE + l * HIDDEN_STRIDE
        w = p_ref[off:off + MID_DIM, 0:MID_DIM]
        b = p_ref[off + MID_DIM:off + MID_DIM + 1, 0:MID_DIM]
        gamma = p_ref[off + MID_DIM + 1:off + MID_DIM + 2, 0:MID_DIM]
        beta = p_ref[off + MID_DIM + 2:off + MID_DIM + 3, 0:MID_DIM]
        z = jnp.dot(h, w, preferred_element_type=jnp.float32) + b
        mu = jnp.mean(z, axis=-1, keepdims=True)
        var = jnp.mean((z - mu) ** 2, axis=-1, keepdims=True)
        z = (z - mu) * jax.lax.rsqrt(var + LN_EPS)
        z = z * gamma + beta
        h = jnp.maximum(z, 0.0)

    # fused dueling heads: one (55 -> 128) matmul.
    # lanes 0..OUT_DIM-1 = adv_output(h)+adv_hook(x)+summed biases, lane OUT_DIM = value,
    # lanes OUT_DIM+1..127 are exactly zero (zero weight cols / zero bias).
    w_head = p_ref[HEAD_BASE:HEAD_BASE + HEAD_K, :]                   # (55, 128)
    b_head = p_ref[HEAD_B_ROW:HEAD_B_ROW + 1, :]                      # (1, 128)
    hx = jnp.concatenate([h, x], axis=-1)                             # (TB, 55)
    va = jnp.dot(hx, w_head, preferred_element_type=jnp.float32) + b_head   # (TB, 128)

    row_sum = jnp.sum(va, axis=-1, keepdims=True)                     # = sum(adv) + value
    value = va[:, VALUE_COL:VALUE_COL + 1]                            # (TB, 1)
    adv_mean = (row_sum - value) * (1.0 / OUT_DIM)
    # lanes 0..5 hold q = value + adv - adv_mean; remaining lanes are discarded by wrapper.
    o_ref[...] = (va + (value - adv_mean)).astype(o_ref.dtype)


# ----------------------------- wrapper -----------------------------
def policy_net_dqn_forward(states, packed_params):
    """PolicyNetDQN.forward(states) (q branch): preprocess in JAX, DuelingFF in Pallas."""
    if states.shape[-1] > 5:
        states = preprocess(states, OUT_DIM)
    # TODO(synk): inDim <= 5 configurations (no preprocess, newIndim == inDim) not wired up.
    x = states.astype(jnp.float32)
    b = x.shape[0]
    pb = _round_up(b, BATCH_TILE)
    if pb != b:
        x = jnp.pad(x, ((0, pb - b), (0, 0)))

    out = pl.pallas_call(
        dueling_ff_kernel,
        out_shape=jax.ShapeDtypeStruct((pb, LANES), jnp.float32),
        grid_spec=pltpu.PrefetchScalarGridSpec(
            num_scalar_prefetch=0,
            grid=(pb // BATCH_TILE,),
            in_specs=[
                pl.BlockSpec((BATCH_TILE, NEW_IN_DIM), lambda i: (i, 0)),
                # whole packed-parameter buffer, same block every step -> VMEM-resident
                pl.BlockSpec((PACK_ROWS, LANES), lambda i: (0, 0)),
            ],
            out_specs=pl.BlockSpec((BATCH_TILE, LANES), lambda i: (i, 0)),
        ),
        compiler_params=pltpu.CompilerParams(dimension_semantics=("parallel",)),
    )(x, packed_params)
    return out[:b, :OUT_DIM]


# ----------------------------- parameter packing -----------------------------
def pack_params(p):
    """Pack all DuelingFF params into one (PACK_ROWS, 128) f32 buffer."""
    buf = jnp.zeros((PACK_ROWS, LANES), jnp.float32)
    buf = buf.at[IN_W_ROW:IN_W_ROW + NEW_IN_DIM, 0:MID_DIM].set(p["w_in"])
    buf = buf.at[IN_B_ROW, 0:MID_DIM].set(p["b_in"])
    for l in range(NUM_HIDDEN):
        off = HIDDEN_BASE + l * HIDDEN_STRIDE
        buf = buf.at[off:off + MID_DIM, 0:MID_DIM].set(p["w_h"][l])
        buf = buf.at[off + MID_DIM, 0:MID_DIM].set(p["b_h"][l])
        buf = buf.at[off + MID_DIM + 1, 0:MID_DIM].set(p["ln_gamma"][l])
        buf = buf.at[off + MID_DIM + 2, 0:MID_DIM].set(p["ln_beta"][l])
    # fused head: rows 0..31 are h-path weights, rows 32..54 are x-hook weights.
    buf = buf.at[HEAD_BASE:HEAD_BASE + MID_DIM, 0:OUT_DIM].set(p["w_adv_out"])
    buf = buf.at[HEAD_BASE:HEAD_BASE + MID_DIM, VALUE_COL].set(p["w_value_out"][:, 0])
    buf = buf.at[HEAD_BASE + MID_DIM:HEAD_BASE + HEAD_K, 0:OUT_DIM].set(p["w_adv_hook"])
    buf = buf.at[HEAD_BASE + MID_DIM:HEAD_BASE + HEAD_K, VALUE_COL].set(p["w_value_hook"][:, 0])
    buf = buf.at[HEAD_B_ROW, 0:OUT_DIM].set(p["b_adv_out"] + p["b_adv_hook"])
    buf = buf.at[HEAD_B_ROW, VALUE_COL].set(p["b_value_out"][0] + p["b_value_hook"][0])
    return buf


# ----------------------------- pure-JAX reference -----------------------------
def policy_net_dqn_reference(states, p):
    if states.shape[-1] > 5:
        states = preprocess(states, OUT_DIM)
    x = states.astype(jnp.float32)
    h = jnp.maximum(x @ p["w_in"] + p["b_in"], 0.0)
    for l in range(NUM_HIDDEN):
        z = h @ p["w_h"][l] + p["b_h"][l]
        mu = jnp.mean(z, axis=-1, keepdims=True)
        var = jnp.mean((z - mu) ** 2, axis=-1, keepdims=True)
        z = (z - mu) * jax.lax.rsqrt(var + LN_EPS)
        z = z * p["ln_gamma"][l] + p["ln_beta"][l]
        h = jnp.maximum(z, 0.0)
    value = h @ p["w_value_out"] + p["b_value_out"] + x @ p["w_value_hook"] + p["b_value_hook"]
    adv = h @ p["w_adv_out"] + p["b_adv_out"] + x @ p["w_adv_hook"] + p["b_adv_hook"]
    return value + (adv - jnp.mean(adv, axis=1, keepdims=True))


# ----------------------------- deterministic parameter init -----------------------------
def init_params(key):
    ks = jax.random.split(key, 14)
    s = 0.1
    return {
        "w_in":         s * jax.random.normal(ks[0], (NEW_IN_DIM, MID_DIM), jnp.float32),
        "b_in":         s * jax.random.normal(ks[1], (MID_DIM,), jnp.float32),
        "w_h":          s * jax.random.normal(ks[2], (NUM_HIDDEN, MID_DIM, MID_DIM), jnp.float32),
        "b_h":          s * jax.random.normal(ks[3], (NUM_HIDDEN, MID_DIM), jnp.float32),
        "ln_gamma":     1.0 + s * jax.random.normal(ks[4], (NUM_HIDDEN, MID_DIM), jnp.float32),
        "ln_beta":      s * jax.random.normal(ks[5], (NUM_HIDDEN, MID_DIM), jnp.float32),
        "w_value_out":  s * jax.random.normal(ks[6], (MID_DIM, 1), jnp.float32),
        "b_value_out":  s * jax.random.normal(ks[7], (1,), jnp.float32),
        "w_value_hook": s * jax.random.normal(ks[8], (NEW_IN_DIM, 1), jnp.float32),
        "b_value_hook": s * jax.random.normal(ks[9], (1,), jnp.float32),
        "w_adv_out":    s * jax.random.normal(ks[10], (MID_DIM, OUT_DIM), jnp.float32),
        "b_adv_out":    s * jax.random.normal(ks[11], (OUT_DIM,), jnp.float32),
        "w_adv_hook":   s * jax.random.normal(ks[12], (NEW_IN_DIM, OUT_DIM), jnp.float32),
        "b_adv_hook":   s * jax.random.normal(ks[13], (OUT_DIM,), jnp.float32),
    }


if __name__ == "__main__":
    root = jax.random.PRNGKey(0)
    k_state, k_idx, k_params = jax.random.split(root, 3)

    # Build a raw state [B, inDim] whose "action feature" columns (4, 9, 14, ...)
    # decode to valid action indices in {-1, 0, ..., numActions-1} when multiplied by 40.
    states = jax.random.uniform(k_state, (BATCH, IN_DIM), jnp.float32)
    n_feat = (IN_DIM - 5) // 5
    feat_cols = jnp.arange(n_feat) * 5 + 4
    idx = jax.random.randint(k_idx, (BATCH, n_feat), -1, OUT_DIM)
    feat = jnp.where(idx >= 0, (idx + 0.5) / 40.0, (idx - 0.5) / 40.0).astype(jnp.float32)
    states = states.at[:, feat_cols].set(feat)

    params = init_params(k_params)
    packed = pack_params(params)

    fwd = jax.jit(policy_net_dqn_forward)   # preprocess + pallas_call fused in one dispatch
    out = jax.block_until_ready(fwd(states, packed))

    ref = policy_net_dqn_reference(states, params)
    assert out.shape == (BATCH, OUT_DIM)
    assert jnp.allclose(out, ref, rtol=1e-3, atol=1e-3), "Pallas kernel mismatch vs JAX reference"

    print("KERNEL_OK")
</pallas_src>

<mosaic_0001>
module attributes {stable_mosaic.version = 11 : i64} {
  func.func @dueling_ff_kernel(%arg0: i32, %arg1: memref<128x23xf32, #tpu.memory_space<vmem>>, %arg2: memref<160x128xf32, #tpu.memory_space<vmem>>, %arg3: memref<128x128xf32, #tpu.memory_space<vmem>>) attributes {dimension_semantics = [#tpu.dimension_semantics<parallel>], iteration_bounds = array<i64: 2>, scalar_prefetch = 0 : i64, scratch_operands = 0 : i64, tpu.core_type = #tpu.core_type<tc>, window_params = [{transform_indices = @transform_0, window_bounds = array<i64: 128, 23>}, {pipeline_mode = #tpu.pipeline_mode<synchronous>, transform_indices = @transform_1, window_bounds = array<i64: 160, 128>}, {transform_indices = @transform_2, window_bounds = array<i64: 128, 128>}]} {
    %c0 = arith.constant 0 : index
    %c0_0 = arith.constant 0 : index
    %0 = vector.load %arg1[%c0, %c0_0] : memref<128x23xf32, #tpu.memory_space<vmem>>, vector<128x23xf32>
    %c0_1 = arith.constant 0 : index
    %c0_2 = arith.constant 0 : index
    %1 = vector.load %arg2[%c0_1, %c0_2] : memref<160x128xf32, #tpu.memory_space<vmem>>, vector<23x32xf32>
    %c23 = arith.constant 23 : index
    %c0_3 = arith.constant 0 : index
    %2 = vector.load %arg2[%c23, %c0_3] : memref<160x128xf32, #tpu.memory_space<vmem>>, vector<1x32xf32>
    %cst = arith.constant dense<0.000000e+00> : vector<128x32xf32>
    %3 = tpu.matmul %0, %1, %cst {dimension_numbers = #tpu.dot_dimension_numbers<[1], [0], [0], [1], [0, 0, 1, 1], [], []>} : vector<128x23xf32>, vector<23x32xf32>, vector<128x32xf32> -> vector<128x32xf32>
    %4 = vector.broadcast %2 : vector<1x32xf32> to vector<128x32xf32>
    %5 = arith.addf %3, %4 : vector<128x32xf32>
    %cst_4 = arith.constant 0.000000e+00 : f32
    %6 = vector.broadcast %cst_4 : f32 to vector<128x32xf32>
    %7 = arith.maximumf %5, %6 : vector<128x32xf32>
    %c24 = arith.constant 24 : index
    %c0_5 = arith.constant 0 : index
    %8 = vector.load %arg2[%c24, %c0_5] : memref<160x128xf32, #tpu.memory_space<vmem>>, vector<32x32xf32>
    %c56 = arith.constant 56 : index
    %c0_6 = arith.constant 0 : index
    %9 = vector.load %arg2[%c56, %c0_6] : memref<160x128xf32, #tpu.memory_space<vmem>>, vector<1x32xf32>
    %c57 = arith.constant 57 : index
    %c0_7 = arith.constant 0 : index
    %10 = vector.load %arg2[%c57, %c0_7] : memref<160x128xf32, #tpu.memory_space<vmem>>, vector<1x32xf32>
    %c58 = arith.constant 58 : index
    %c0_8 = arith.constant 0 : index
    %11 = vector.load %arg2[%c58, %c0_8] : memref<160x128xf32, #tpu.memory_space<vmem>>, vector<1x32xf32>
    %cst_9 = arith.constant dense<0.000000e+00> : vector<128x32xf32>
    %12 = tpu.matmul %7, %8, %cst_9 {dimension_numbers = #tpu.dot_dimension_numbers<[1], [0], [0], [1], [0, 0, 1, 1], [], []>} : vector<128x32xf32>, vector<32x32xf32>, vector<128x32xf32> -> vector<128x32xf32>
    %13 = vector.broadcast %9 : vector<1x32xf32> to vector<128x32xf32>
    %14 = arith.addf %12, %13 : vector<128x32xf32>
    %cst_10 = arith.constant dense<0.000000e+00> : vector<128xf32>
    %15 = vector.multi_reduction <add>, %14, %cst_10 [1] : vector<128x32xf32> to vector<128xf32>
    %16 = vector.shape_cast %15 : vector<128xf32> to vector<128x1xf32>
    %cst_11 = arith.constant 3.200000e+01 : f32
    %17 = vector.broadcast %cst_11 : f32 to vector<128x1xf32>
    %18 = arith.divf %16, %17 : vector<128x1xf32>
    %19 = vector.broadcast %18 : vector<128x1xf32> to vector<128x32xf32>
    %20 = arith.subf %14, %19 : vector<128x32xf32>
    %21 = arith.mulf %20, %20 : vector<128x32xf32>
    %cst_12 = arith.constant dense<0.000000e+00> : vector<128xf32>
    %22 = vector.multi_reduction <add>, %21, %cst_12 [1] : vector<128x32xf32> to vector<128xf32>
    %23 = vector.shape_cast %22 : vector<128xf32> to vector<128x1xf32>
    %cst_13 = arith.constant 3.200000e+01 : f32
    %24 = vector.broadcast %cst_13 : f32 to vector<128x1xf32>
    %25 = arith.divf %23, %24 : vector<128x1xf32>
    %26 = vector.broadcast %18 : vector<128x1xf32> to vector<128x32xf32>
    %27 = arith.subf %14, %26 : vector<128x32xf32>
    %cst_14 = arith.constant 9.99999974E-6 : f32
    %28 = vector.broadcast %cst_14 : f32 to vector<128x1xf32>
    %29 = arith.addf %25, %28 : vector<128x1xf32>
    %30 = math.rsqrt %29 : vector<128x1xf32>
    %31 = vector.broadcast %30 : vector<128x1xf32> to vector<128x32xf32>
    %32 = arith.mulf %27, %31 : vector<128x32xf32>
    %33 = vector.broadcast %10 : vector<1x32xf32> to vector<128x32xf32>
    %34 = arith.mulf %32, %33 : vector<128x32xf32>
    %35 = vector.broadcast %11 : vector<1x32xf32> to vector<128x32xf32>
    %36 = arith.addf %34, %35 : vector<128x32xf32>
    %cst_15 = arith.constant 0.000000e+00 : f32
    %37 = vector.broadcast %cst_15 : f32 to vector<128x32xf32>
    %38 = arith.maximumf %36, %37 : vector<128x32xf32>
    %c64 = arith.constant 64 : index
    %c0_16 = arith.constant 0 : index
    %39 = vector.load %arg2[%c64, %c0_16] : memref<160x128xf32, #tpu.memory_space<vmem>>, vector<32x32xf32>
    %c96 = arith.constant 96 : index
    %c0_17 = arith.constant 0 : index
    %40 = vector.load %arg2[%c96, %c0_17] : memref<160x128xf32, #tpu.memory_space<vmem>>, vector<1x32xf32>
    %c97 = arith.constant 97 : index
    %c0_18 = arith.constant 0 : index
    %41 = vector.load %arg2[%c97, %c0_18] : memref<160x128xf32, #tpu.memory_space<vmem>>, vector<1x32xf32>
    %c98 = arith.constant 98 : index
    %c0_19 = arith.constant 0 : index
    %42 = vector.load %arg2[%c98, %c0_19] : memref<160x128xf32, #tpu.memory_space<vmem>>, vector<1x32xf32>
    %cst_20 = arith.constant dense<0.000000e+00> : vector<128x32xf32>
    %43 = tpu.matmul %38, %39, %cst_20 {dimension_numbers = #tpu.dot_dimension_numbers<[1], [0], [0], [1], [0, 0, 1, 1], [], []>} : vector<128x32xf32>, vector<32x32xf32>, vector<128x32xf32> -> vector<128x32xf32>
    %44 = vector.broadcast %40 : vector<1x32xf32> to vector<128x32xf32>
    %45 = arith.addf %43, %44 : vector<128x32xf32>
    %cst_21 = arith.constant dense<0.000000e+00> : vector<128xf32>
    %46 = vector.multi_reduction <add>, %45, %cst_21 [1] : vector<128x32xf32> to vector<128xf32>
    %47 = vector.shape_cast %46 : vector<128xf32> to vector<128x1xf32>
    %cst_22 = arith.constant 3.200000e+01 : f32
    %48 = vector.broadcast %cst_22 : f32 to vector<128x1xf32>
    %49 = arith.divf %47, %48 : vector<128x1xf32>
    %50 = vector.broadcast %49 : vector<128x1xf32> to vector<128x32xf32>
    %51 = arith.subf %45, %50 : vector<128x32xf32>
    %52 = arith.mulf %51, %51 : vector<128x32xf32>
    %cst_23 = arith.constant dense<0.000000e+00> : vector<128xf32>
    %53 = vector.multi_reduction <add>, %52, %cst_23 [1] : vector<128x32xf32> to vector<128xf32>
    %54 = vector.shape_cast %53 : vector<128xf32> to vector<128x1xf32>
    %cst_24 = arith.constant 3.200000e+01 : f32
    %55 = vector.broadcast %cst_24 : f32 to vector<128x1xf32>
    %56 = arith.divf %54, %55 : vector<128x1xf32>
    %57 = vector.broadcast %49 : vector<128x1xf32> to vector<128x32xf32>
    %58 = arith.subf %45, %57 : vector<128x32xf32>
    %cst_25 = arith.constant 9.99999974E-6 : f32
    %59 = vector.broadcast %cst_25 : f32 to vector<128x1xf32>
    %60 = arith.addf %56, %59 : vector<128x1xf32>
    %61 = math.rsqrt %60 : vector<128x1xf32>
    %62 = vector.broadcast %61 : vector<128x1xf32> to vector<128x32xf32>
    %63 = arith.mulf %58, %62 : vector<128x32xf32>
    %64 = vector.broadcast %41 : vector<1x32xf32> to vector<128x32xf32>
    %65 = arith.mulf %63, %64 : vector<128x32xf32>
    %66 = vector.broadcast %42 : vector<1x32xf32> to vector<128x32xf32>
    %67 = arith.addf %65, %66 : vector<128x32xf32>
    %cst_26 = arith.constant 0.000000e+00 : f32
    %68 = vector.broadcast %cst_26 : f32 to vector<128x32xf32>
    %69 = arith.maximumf %67, %68 : vector<128x32xf32>
    %c104 = arith.constant 104 : index
    %c0_27 = arith.constant 0 : index
    %70 = vector.load %arg2[%c104, %c0_27] : memref<160x128xf32, #tpu.memory_space<vmem>>, vector<55x128xf32>
    %c159 = arith.constant 159 : index
    %c0_28 = arith.constant 0 : index
    %71 = vector.load %arg2[%c159, %c0_28] : memref<160x128xf32, #tpu.memory_space<vmem>>, vector<1x128xf32>
    %72 = tpu.concatenate %69, %0 in 1 : vector<128x32xf32>, vector<128x23xf32> -> vector<128x55xf32>
    %cst_29 = arith.constant dense<0.000000e+00> : vector<128x128xf32>
    %73 = tpu.matmul %72, %70, %cst_29 {dimension_numbers = #tpu.dot_dimension_numbers<[1], [0], [0], [1], [0, 0, 1, 1], [], []>} : vector<128x55xf32>, vector<55x128xf32>, vector<128x128xf32> -> vector<128x128xf32>
    %74 = vector.broadcast %71 : vector<1x128xf32> to vector<128x128xf32>
    %75 = arith.addf %73, %74 : vector<128x128xf32>
    %cst_30 = arith.constant dense<0.000000e+00> : vector<128xf32>
    %76 = vector.multi_reduction <add>, %75, %cst_30 [1] : vector<128x128xf32> to vector<128xf32>
    %77 = vector.shape_cast %76 : vector<128xf32> to vector<128x1xf32>
    %78 = vector.extract_strided_slice %75 {offsets = [0, 6], sizes = [128, 1], strides = [1, 1]} : vector<128x128xf32> to vector<128x1xf32>
    %79 = arith.subf %77, %78 : vector<128x1xf32>
    %cst_31 = arith.constant 0.166666672 : f32
    %80 = vector.broadcast %cst_31 : f32 to vector<128x1xf32>
    %81 = arith.mulf %79, %80 : vector<128x1xf32>
    %82 = arith.subf %78, %81 : vector<128x1xf32>
    %83 = vector.broadcast %82 : vector<128x1xf32> to vector<128x128xf32>
    %84 = arith.addf %75, %83 : vector<128x128xf32>
    %c0_32 = arith.constant 0 : index
    %c0_33 = arith.constant 0 : index
    %85 = vector.load %arg3[%c0_32, %c0_33] : memref<128x128xf32, #tpu.memory_space<vmem>>, vector<128x128xf32>
    tpu.vector_store %arg3[%c0_32, %c0_33], %84 {strides = array<i32>} : memref<128x128xf32, #tpu.memory_space<vmem>>, vector<128x128xf32>,
    return
  }
  func.func @transform_0(%arg0: i32) -> (i32, i32) {
    %c0_i32 = arith.constant 0 : i32
    %c0_i32_0 = arith.constant 0 : i32
    return %arg0, %c0_i32 : i32, i32
  }
  func.func @transform_1(%arg0: i32) -> (i32, i32) {
    %c0_i32 = arith.constant 0 : i32
    %c0_i32_0 = arith.constant 0 : i32
    %c0_i32_1 = arith.constant 0 : i32
    return %c0_i32, %c0_i32_0 : i32, i32
  }
  func.func @transform_2(%arg0: i32) -> (i32, i32) {
    %c0_i32 = arith.constant 0 : i32
    %c0_i32_0 = arith.constant 0 : i32
    return %arg0, %c0_i32 : i32, i32
  }
}

</mosaic_0001>

<llo_original>
// kernel: policy_net_dqn_forward.1
$region0: #{policy_net_dqn_forward.1}
  #allocation0 [shape = 'u32[]', space=smem, size = 0x4, offset = 0x4, fixed_abs, tag = 'smem constant byte address 0x4 - core index']
  #allocation1 [shape = 'u32[144,128]{1,0:T(1,128)}', space=vmem, size = 0x12000, scoped, tag = 'internal scratch']
  %s0 = inlined_call_operand.vmem [shape: f32[256,23], index: 0, kind: input, shape index: {}]
  %s1 = inlined_call_operand.vmem [shape: f32[160,128], index: 1, kind: input, shape index: {}]
  %s2 = inlined_call_operand.vmem [shape: f32[256,128], index: 2, kind: output, shape index: {}]
  %s3 = sld [smem:[#allocation0]]
  $region41: #{policy_net_dqn_forward.1} parent=0
    _
  %s5 = ssub.s32 1, %s3
  %s6 = scalar_select 0, %s5, %s3
  loop: start=0, step=1, limit=4
  $region2: #{policy_net_dqn_forward.1} parent=0 // loop_pre_header
    _
  $region3: #{policy_net_dqn_forward.1} parent=0 // loop_header
    %s8 = sphi 0, %s12
    %p9 = scmp.ge.s32.totalorder %s8, 4
    %s18 = sphi 0, %s20
    %s21 = sphi 0, %s18
    %s22 = sphi 0, %s21
    %s38 = sphi 0, %s22
    %s42 = sphi 0, %s42
    %s44 = sphi 0, %s42
    %s45 = sphi 0, %s44
    %s59 = sphi 0, %s45
    %s65 = sphi 0, %s67
    %s68 = sphi 0, %s65
    %s69 = sphi 0, %s68
    %s85 = sphi 0, %s69
  $region4: #{policy_net_dqn_forward.1} parent=0 // loop_header_branch
    %11 = sbr.rel (%p9) target = $region8
  $region5: #{policy_net_dqn_forward.1} parent=0 // loop_body
    %s13 = ssub.s32 %s8, 1
    %s14 = ssub.s32 %s8, 2
    %s15 = sadd.s32 %s8, 1
    %s16 = ssub.s32 %s8, %s15
    %p17 = scmp.eq.s32.totalorder %s16, 0
    %s19 = sadd.s32 %s18, 1
    %s20 = scalar_select %p17, %s18, %s19
    %p23 = pneg %p17
    %p24 = scmp.eq.s32.totalorder %s8, 1
    %p25 = por %p23, %p24
    %p26 = scmp.ne.s32.totalorder %s18, %s21
    %p27 = scmp.eq.s32.totalorder %s8, 0
    %p28 = por %p26, %p27
    %p29 = scmp.ne.s32.totalorder %s18, %s21
    %p30 = scmp.eq.s32.totalorder %s13, 1
    %p31 = por %p29, %p30
    %p32 = scmp.ne.s32.totalorder %s21, %s22
    %p33 = scmp.eq.s32.totalorder %s13, 0
    %p34 = por %p32, %p33
    %p35 = scmp.ne.s32.totalorder %s21, %s22
    %p36 = scmp.eq.s32.totalorder %s14, 1
    %p37 = por %p35, %p36
    %p39 = scmp.ne.s32.totalorder %s22, %s38
    %p40 = scmp.eq.s32.totalorder %s14, 0
    %p41 = por %p39, %p40
    %s43 = sadd.s32 %s42, 1
    %p46 = scmp.eq.s32.totalorder %s8, 1
    %p47 = scmp.ne.s32.totalorder %s42, %s44
    %p48 = scmp.eq.s32.totalorder %s8, 0
    %p49 = por %p47, %p48
    %p50 = scmp.ne.s32.totalorder %s42, %s44
    %p51 = scmp.eq.s32.totalorder %s13, 1
    %p52 = por %p50, %p51
    %p53 = scmp.ne.s32.totalorder %s44, %s45
    %p54 = scmp.eq.s32.totalorder %s13, 0
    %p55 = por %p53, %p54
    %p56 = scmp.ne.s32.totalorder %s44, %s45
    %p57 = scmp.eq.s32.totalorder %s14, 1
    %p58 = por %p56, %p57
    %p60 = scmp.ne.s32.totalorder %s45, %s59
    %p61 = scmp.eq.s32.totalorder %s14, 0
    %p62 = por %p60, %p61
    %s63 = ssub.s32 %s8, %s15
    %p64 = scmp.eq.s32.totalorder %s63, 0
    %s66 = sadd.s32 %s65, 1
    %s67 = scalar_select %p64, %s65, %s66
    %p70 = pneg %p64
    %p71 = scmp.eq.s32.totalorder %s8, 1
    %p72 = por %p70, %p71
    %p73 = scmp.ne.s32.totalorder %s65, %s68
    %p74 = scmp.eq.s32.totalorder %s8, 0
    %p75 = por %p73, %p74
    %p76 = scmp.ne.s32.totalorder %s65, %s68
    %p77 = scmp.eq.s32.totalorder %s13, 1
    %p78 = por %p76, %p77
    %p79 = scmp.ne.s32.totalorder %s68, %s69
    %p80 = scmp.eq.s32.totalorder %s13, 0
    %p81 = por %p79, %p80
    %p82 = scmp.ne.s32.totalorder %s68, %s69
    %p83 = scmp.eq.s32.totalorder %s14, 1
    %p84 = por %p82, %p83
    %p86 = scmp.ne.s32.totalorder %s69, %s85
    %p87 = scmp.eq.s32.totalorder %s14, 0
    %p88 = por %p86, %p87
    %p89 = scmp.le.s32.totalorder 1, %s8
    %p90 = scmp.lt.s32.totalorder %s8, 3
    %p91 = pnand %p89, %p90
    %p92 = pneg %p91
    // Predicated region
    $region9: #{policy_net_dqn_forward.1} parent=5 // pred_check
      _
    $region10: #{policy_net_dqn_forward.1} parent=5 // pred_check_branch
      %94 = sbr.rel (%p91) target = $region12
    $region11: #{policy_net_dqn_forward.1} parent=5 // pred_region
      %s95 = ssub.s32 %s8, 1
      // Predicated region
      $region13: #{policy_net_dqn_forward.1} parent=11 // pred_check
        %p96 = pneg %p55
      $region14: #{policy_net_dqn_forward.1} parent=11 // pred_check_branch
        %98 = sbr.rel (%p96) target = $region16
      $region15: #{policy_net_dqn_forward.1} parent=11 // pred_region
        _
      $region16: #{policy_net_dqn_forward.1} parent=11 // pred_fallthru
        _
    $region12: #{policy_net_dqn_forward.1} parent=5 // pred_fallthru
      _
    %p99 = scmp.lt.s32.totalorder %s8, 2
    // Predicated region
    $region17: #{policy_net_dqn_forward.1} parent=5 // pred_check
      %p100 = pneg %p99
    $region18: #{policy_net_dqn_forward.1} parent=5 // pred_check_branch
      %102 = sbr.rel (%p100) target = $region20
    $region19: #{policy_net_dqn_forward.1} parent=5 // pred_region
      // Predicated region
      $region21: #{policy_net_dqn_forward.1} parent=19 // pred_check
        %p103 = pneg %p28
      $region22: #{policy_net_dqn_forward.1} parent=19 // pred_check_branch
        %105 = sbr.rel (%p103) target = $region24
      $region23: #{policy_net_dqn_forward.1} parent=19 // pred_region
        %s106 = smul.u32 16, %s8
        %p107 = scmp.lt.s32.totalorder %s106, 31
        %s108 = scalar_select %p107, %s106, 31
        %s109 = smul.addr %s108, 8
        %s110 = scalar_lea.vmem %s0, %s109
        %s111 = smul.u32 16, %s8
      $region24: #{policy_net_dqn_forward.1} parent=19 // pred_fallthru
        _
    $region20: #{policy_net_dqn_forward.1} parent=5 // pred_fallthru
      _
    %p112 = scmp.le.s32.totalorder 1, %s8
    %p113 = scmp.lt.s32.totalorder %s8, 3
    %p114 = pnand %p112, %p113
    %p115 = pneg %p114
    // Predicated region
    $region25: #{policy_net_dqn_forward.1} parent=5 // pred_check
      _
    $region26: #{policy_net_dqn_forward.1} parent=5 // pred_check_branch
      %117 = sbr.rel (%p114) target = $region28
    $region27: #{policy_net_dqn_forward.1} parent=5 // pred_region
      %s118 = ssub.s32 %s8, 1
      %s119 = smul.u32 16, %s13
      %p120 = scmp.lt.s32.totalorder %s119, 31
      %s121 = scalar_select %p120, %s119, 31
      %s122 = smul.addr %s121, 8
      %s123 = scalar_lea.vmem %s0, %s122
      %p124 = pneg %p34
      %p125 = pneg %p31
      %p126 = pneg %p55
      %p127 = pneg %p52
      %p128 = pneg %p81
      %p129 = pneg %p78
      %s130 = smul.u32 16, %s13
      %p131 = scmp.lt.s32.totalorder %s130, 31
      %s132 = scalar_select %p131, %s130, 31
      %s133 = smul.addr %s132, 8
      %s134 = scalar_lea.vmem %s2, %s133
      %s135 = smul.u32 16, %s13
      %p136 = scmp.lt.s32.totalorder %s135, 31
      %s137 = scalar_select %p136, %s135, 31
      %s138 = smul.addr %s137, 8
      %s139 = scalar_lea.vmem %s0, %s138
      %s140 = smul.u32 16, %s13
      %s141 = smul.u32 16, %s13
      %p142 = scmp.lt.s32.totalorder %s141, 31
      %s143 = scalar_select %p142, %s141, 31
      %s144 = smul.addr %s143, 8
      %s145 = scalar_lea.vmem %s2, %s144
      %s146 = smul.u32 16, %s13
      %v147 = vld [vmem:[%s139] sm:$0xff]
      %v148 = vld [vmem:[%s139 + $0x8] sm:$0xff]
      %v149 = vld [vmem:[%s139 + $0x10] sm:$0xff]
      %v150 = vld [vmem:[%s139 + $0x18] sm:$0xff]
      %v151 = vld [vmem:[%s139 + $0x20] sm:$0xff]
      %v152 = vld [vmem:[%s139 + $0x28] sm:$0xff]
      %v153 = vld [vmem:[%s139 + $0x30] sm:$0xff]
      %v154 = vld [vmem:[%s139 + $0x38] sm:$0xff]
      %v155 = vld [vmem:[%s139 + $0x40] sm:$0xff]
      %v156 = vld [vmem:[%s139 + $0x48] sm:$0xff]
      %v157 = vld [vmem:[%s139 + $0x50] sm:$0xff]
      %v158 = vld [vmem:[%s139 + $0x58] sm:$0xff]
      %v159 = vld [vmem:[%s139 + $0x60] sm:$0xff]
      %v160 = vld [vmem:[%s139 + $0x68] sm:$0xff]
      %v161 = vld [vmem:[%s139 + $0x70] sm:$0xff]
      %v162 = vld [vmem:[%s139 + $0x78] sm:$0xff]
      %v163 = vld [vmem:[%s1] sm:$0xff]
      %v164 = vld [vmem:[%s1 + $0x8] sm:$0xff]
      %v165 = vld [vmem:[%s1 + $0x10] sm:$0x7f]
      %v166 = vld [vmem:[%s1 + $0x17] sm:$0x1]
      %v167 = vlaneseq
      %v168 = vshrl.u32 %v167, 7
      %v169 = vsub.s32 0, %v168
      %v170 = vrot.slane %v166, %v169
      %vm171 = vcmask 187392
      %v173 = vsel %vm171, %v147, 0
      %v176 = vsel %vm171, %v148, 0
      %v179 = vsel %vm171, %v149, 0
      %v182 = vsel %vm171, %v150, 0
      %v185 = vsel %vm171, %v151, 0
      %v188 = vsel %vm171, %v152, 0
      %v191 = vsel %vm171, %v153, 0
      %v194 = vsel %vm171, %v154, 0
      %v197 = vsel %vm171, %v155, 0
      %v200 = vsel %vm171, %v156, 0
      %v203 = vsel %vm171, %v157, 0
      %v206 = vsel %vm171, %v158, 0
      %v209 = vsel %vm171, %v159, 0
      %v212 = vsel %vm171, %v160, 0
      %v215 = vsel %vm171, %v161, 0
      %v218 = vsel %vm171, %v162, 0
      %vm220 = vcmask 1046528
      %v222 = vsel %vm220, %v165, 0
      %224 = vmatprep.subr.mxu0 0.0
      %225 = vmatpush1.msra.mxu0 %v163
      %226 = vmatprep.subr.mxu0 0.0
      %227 = vmatpush1.msra.mxu0 %v164
      %228 = vmatprep.subr.mxu0 0.0
      %229 = vmatpush1.msra.mxu0 %v222
      %230 = vmatprep.subr.mxu0 0.0
      %231 = vmatpush1.msra.mxu0 0.0
      %232 = vmatprep.subr.mxu0 0.0
      %233 = vmatpush1.msra.mxu0 0.0
      %234 = vmatprep.subr.mxu0 0.0
      %235 = vmatpush1.msra.mxu0 0.0
      %236 = vmatprep.subr.mxu0 0.0
      %237 = vmatpush1.msra.mxu0 0.0
      %238 = vmatprep.subr.mxu0 0.0
      %239 = vmatpush1.msra.mxu0 0.0
      %240 = vmatprep.subr.mxu0 0.0
      %241 = vmatpush1.msra.mxu0 0.0
      %242 = vmatprep.subr.mxu0 0.0
      %243 = vmatpush1.msra.mxu0 0.0
      %244 = vmatprep.subr.mxu0 0.0
      %245 = vmatpush1.msra.mxu0 0.0
      %246 = vmatprep.subr.mxu0 0.0
      %247 = vmatpush1.msra.mxu0 0.0
      %248 = vmatprep.subr.mxu0 0.0
      %249 = vmatpush1.msra.mxu0 0.0
      %250 = vmatprep.subr.mxu0 0.0
      %251 = vmatpush1.msra.mxu0 0.0
      %252 = vmatprep.subr.mxu0 0.0
      %253 = vmatpush1.msra.mxu0 0.0
      %254 = vmatprep.subr.mxu0 0.0
      %255 = vmatpush1.msra.mxu0 0.0
      %256 = vmatprep.subr.mxu0 0.0
      %257 = vmatpush1.msra.mxu0 0.0
      %258 = vmatprep.subr.mxu0 0.0
      %259 = vmatpush1.msra.mxu0 0.0
      %260 = vmatprep.subr.mxu0 0.0
      %261 = vmatpush1.msra.mxu0 0.0
      %262 = vmatprep.subr.mxu0 0.0
      %263 = vmatpush1.msra.mxu0 0.0
      %264 = vmatprep.subr.mxu0 0.0
      %265 = vmatpush1.msra.mxu0 0.0
      %266 = vmatprep.subr.mxu0 0.0
      %267 = vmatpush1.msra.mxu0 0.0
      %268 = vmatprep.subr.mxu0 0.0
      %269 = vmatpush1.msra.mxu0 0.0
      %270 = vmatprep.subr.mxu0 0.0
      %271 = vmatpush1.msra.mxu0 0.0
      %272 = vmatprep.subr.mxu0 0.0
      %273 = vmatpush1.msra.mxu0 0.0
      %274 = vmatprep.subr.mxu0 0.0
      %275 = vmatpush1.msra.mxu0 0.0
      %276 = vmatprep.subr.mxu0 0.0
      %277 = vmatpush1.msra.mxu0 0.0
      %278 = vmatprep.subr.mxu0 0.0
      %279 = vmatpush1.msra.mxu0 0.0
      %280 = vmatprep.subr.mxu0 0.0
      %281 = vmatpush1.msra.mxu0 0.0
      %282 = vmatprep.subr.mxu0 0.0
      %283 = vmatpush1.msra.mxu0 0.0
      %284 = vmatprep.subr.mxu0 0.0
      %285 = vmatpush1.msra.mxu0 0.0
      %286 = vmatprep.subr.mxu0 0.0
      %287 = vmatpush1.msra.mxu0 0.0
      %288 = vmatprep.mubr.f32.mxu0 0.0
      %289 = vmatmul.mubr.f32.gmra.mrb[0].mxu0 %v173
      %v290 = vpop.f32.mrb[0].mxu0
      %v291 = vadd.f32 %v170, %v290
      %v292 = vpop.f32.mrb[0].mxu0
      %293 = vmatprep.mubr.f32.mxu0 0.0
      %294 = vmatmul.mubr.f32.gmra.mrb[0].mxu0 %v176
      %v295 = vpop.f32.mrb[0].mxu0
      %v296 = vadd.f32 %v170, %v295
      %v297 = vpop.f32.mrb[0].mxu0
      %298 = vmatprep.mubr.f32.mxu0 0.0
      %299 = vmatmul.mubr.f32.gmra.mrb[0].mxu0 %v179
      %v300 = vpop.f32.mrb[0].mxu0
      %v301 = vadd.f32 %v170, %v300
      %v302 = vpop.f32.mrb[0].mxu0
      %303 = vmatprep.mubr.f32.mxu0 0.0
      %304 = vmatmul.mubr.f32.gmra.mrb[0].mxu0 %v182
      %v305 = vpop.f32.mrb[0].mxu0
      %v306 = vadd.f32 %v170, %v305
      %v307 = vpop.f32.mrb[0].mxu0
      %308 = vmatprep.mubr.f32.mxu0 0.0
      %309 = vmatmul.mubr.f32.gmra.mrb[0].mxu0 %v185
      %v310 = vpop.f32.mrb[0].mxu0
      %v311 = vadd.f32 %v170, %v310
      %v312 = vpop.f32.mrb[0].mxu0
      %313 = vmatprep.mubr.f32.mxu0 0.0
      %314 = vmatmul.mubr.f32.gmra.mrb[0].mxu0 %v188
      %v315 = vpop.f32.mrb[0].mxu0
      %v316 = vadd.f32 %v170, %v315
      %v317 = vpop.f32.mrb[0].mxu0
      %318 = vmatprep.mubr.f32.mxu0 0.0
      %319 = vmatmul.mubr.f32.gmra.mrb[0].mxu0 %v191
      %v320 = vpop.f32.mrb[0].mxu0
      %v321 = vadd.f32 %v170, %v320
      %v322 = vpop.f32.mrb[0].mxu0
      %323 = vmatprep.mubr.f32.mxu0 0.0
      %324 = vmatmul.mubr.f32.gmra.mrb[0].mxu0 %v194
      %v325 = vpop.f32.mrb[0].mxu0
      %v326 = vadd.f32 %v170, %v325
      %v327 = vpop.f32.mrb[0].mxu0
      %328 = vmatprep.mubr.f32.mxu0 0.0
      %329 = vmatmul.mubr.f32.gmra.mrb[0].mxu0 %v197
      %v330 = vpop.f32.mrb[0].mxu0
      %v331 = vadd.f32 %v170, %v330
      %v332 = vpop.f32.mrb[0].mxu0
      %333 = vmatprep.mubr.f32.mxu0 0.0
      %334 = vmatmul.mubr.f32.gmra.mrb[0].mxu0 %v200
      %v335 = vpop.f32.mrb[0].mxu0
      %v336 = vadd.f32 %v170, %v335
      %v337 = vpop.f32.mrb[0].mxu0
      %338 = vmatprep.mubr.f32.mxu0 0.0
      %339 = vmatmul.mubr.f32.gmra.mrb[0].mxu0 %v203
      %v340 = vpop.f32.mrb[0].mxu0
      %v341 = vadd.f32 %v170, %v340
      %v342 = vpop.f32.mrb[0].mxu0
      %343 = vmatprep.mubr.f32.mxu0 0.0
      %344 = vmatmul.mubr.f32.gmra.mrb[0].mxu0 %v206
      %v345 = vpop.f32.mrb[0].mxu0
      %v346 = vadd.f32 %v170, %v345
      %v347 = vpop.f32.mrb[0].mxu0
      %348 = vmatprep.mubr.f32.mxu0 0.0
      %349 = vmatmul.mubr.f32.gmra.mrb[0].mxu0 %v209
      %v350 = vpop.f32.mrb[0].mxu0
      %v351 = vadd.f32 %v170, %v350
      %v352 = vpop.f32.mrb[0].mxu0
      %353 = vmatprep.mubr.f32.mxu0 0.0
      %354 = vmatmul.mubr.f32.gmra.mrb[0].mxu0 %v212
      %v355 = vpop.f32.mrb[0].mxu0
      %v356 = vadd.f32 %v170, %v355
      %v357 = vpop.f32.mrb[0].mxu0
      %358 = vmatprep.mubr.f32.mxu0 0.0
      %359 = vmatmul.mubr.f32.gmra.mrb[0].mxu0 %v215
      %v360 = vpop.f32.mrb[0].mxu0
      %v361 = vadd.f32 %v170, %v360
      %v362 = vpop.f32.mrb[0].mxu0
      %363 = vmatprep.mubr.f32.mxu0 0.0
      %364 = vmatmul.mubr.f32.gmra.mrb[0].mxu0 %v218
      %v365 = vpop.f32.mrb[0].mxu0
      %v366 = vadd.f32 %v170, %v365
      %v367 = vpop.f32.mrb[0].mxu0
      %368 = vdwg.mxu0
      %v369 = vmax.f32 %v291, 0.0
      %v370 = vmax.f32 %v296, 0.0
      %v371 = vmax.f32 %v301, 0.0
      %v372 = vmax.f32 %v306, 0.0
      %v373 = vmax.f32 %v311, 0.0
      %v374 = vmax.f32 %v316, 0.0
      %v375 = vmax.f32 %v321, 0.0
      %v376 = vmax.f32 %v326, 0.0
      %v377 = vmax.f32 %v331, 0.0
      %v378 = vmax.f32 %v336, 0.0
      %v379 = vmax.f32 %v341, 0.0
      %v380 = vmax.f32 %v346, 0.0
      %v381 = vmax.f32 %v351, 0.0
      %v382 = vmax.f32 %v356, 0.0
      %v383 = vmax.f32 %v361, 0.0
      %v384 = vmax.f32 %v366, 0.0
      %v385 = vld [vmem:[%s1 + $0x18] sm:$0xff]
      %v386 = vld [vmem:[%s1 + $0x20] sm:$0xff]
      %v387 = vld [vmem:[%s1 + $0x28] sm:$0xff]
      %v388 = vld [vmem:[%s1 + $0x30] sm:$0xff]
      %v389 = vld [vmem:[%s1 + $0x38] sm:$0x1]
      %v390 = vld [vmem:[%s1 + $0x39] sm:$0x1]
      %v391 = vld [vmem:[%s1 + $0x3a] sm:$0x1]
      %v392 = vlaneseq
      %v393 = vshrl.u32 %v392, 7
      %v394 = vsub.s32 0, %v393
      %v395 = vrot.slane %v389, %v394
      %vm396 = vcmask 261120
      %v398 = vsel %vm396, %v369, 0
      %v401 = vsel %vm396, %v370, 0
      %v404 = vsel %vm396, %v371, 0
      %v407 = vsel %vm396, %v372, 0
      %v410 = vsel %vm396, %v373, 0
      %v413 = vsel %vm396, %v374, 0
      %v416 = vsel %vm396, %v375, 0
      %v419 = vsel %vm396, %v376, 0
      %v422 = vsel %vm396, %v377, 0
      %v425 = vsel %vm396, %v378, 0
      %v428 = vsel %vm396, %v379, 0
      %v431 = vsel %vm396, %v380, 0
      %v434 = vsel %vm396, %v381, 0
      %v437 = vsel %vm396, %v382, 0
      %v440 = vsel %vm396, %v383, 0
      %v443 = vsel %vm396, %v384, 0
      %445 = vmatprep.subr.mxu0 0.0
      %446 = vmatpush1.msra.mxu0 %v385
      %447 = vmatprep.subr.mxu0 0.0
      %448 = vmatpush1.msra.mxu0 %v386
      %449 = vmatprep.subr.mxu0 0.0
      %450 = vmatpush1.msra.mxu0 %v387
      %451 = vmatprep.subr.mxu0 0.0
      %452 = vmatpush1.msra.mxu0 %v388
      %453 = vmatprep.subr.mxu0 0.0
      %454 = vmatpush1.msra.mxu0 0.0
      %455 = vmatprep.subr.mxu0 0.0
      %456 = vmatpush1.msra.mxu0 0.0
      %457 = vmatprep.subr.mxu0 0.0
      %458 = vmatpush1.msra.mxu0 0.0
      %459 = vmatprep.subr.mxu0 0.0
      %460 = vmatpush1.msra.mxu0 0.0
      %461 = vmatprep.subr.mxu0 0.0
      %462 = vmatpush1.msra.mxu0 0.0
      %463 = vmatprep.subr.mxu0 0.0
      %464 = vmatpush1.msra.mxu0 0.0
      %465 = vmatprep.subr.mxu0 0.0
      %466 = vmatpush1.msra.mxu0 0.0
      %467 = vmatprep.subr.mxu0 0.0
      %468 = vmatpush1.msra.mxu0 0.0
      %469 = vmatprep.subr.mxu0 0.0
      %470 = vmatpush1.msra.mxu0 0.0
      %471 = vmatprep.subr.mxu0 0.0
      %472 = vmatpush1.msra.mxu0 0.0
      %473 = vmatprep.subr.mxu0 0.0
      %474 = vmatpush1.msra.mxu0 0.0
      %475 = vmatprep.subr.mxu0 0.0
      %476 = vmatpush1.msra.mxu0 0.0
      %477 = vmatprep.subr.mxu0 0.0
      %478 = vmatpush1.msra.mxu0 0.0
      %479 = vmatprep.subr.mxu0 0.0
      %480 = vmatpush1.msra.mxu0 0.0
      %481 = vmatprep.subr.mxu0 0.0
      %482 = vmatpush1.msra.mxu0 0.0
      %483 = vmatprep.subr.mxu0 0.0
      %484 = vmatpush1.msra.mxu0 0.0
      %485 = vmatprep.subr.mxu0 0.0
      %486 = vmatpush1.msra.mxu0 0.0
      %487 = vmatprep.subr.mxu0 0.0
      %488 = vmatpush1.msra.mxu0 0.0
      %489 = vmatprep.subr.mxu0 0.0
      %490 = vmatpush1.msra.mxu0 0.0
      %491 = vmatprep.subr.mxu0 0.0
      %492 = vmatpush1.msra.mxu0 0.0
      %493 = vmatprep.subr.mxu0 0.0
      %494 = vmatpush1.msra.mxu0 0.0
      %495 = vmatprep.subr.mxu0 0.0
      %496 = vmatpush1.msra.mxu0 0.0
      %497 = vmatprep.subr.mxu0 0.0
      %498 = vmatpush1.msra.mxu0 0.0
      %499 = vmatprep.subr.mxu0 0.0
      %500 = vmatpush1.msra.mxu0 0.0
      %501 = vmatprep.subr.mxu0 0.0
      %502 = vmatpush1.msra.mxu0 0.0
      %503 = vmatprep.subr.mxu0 0.0
      %504 = vmatpush1.msra.mxu0 0.0
      %505 = vmatprep.subr.mxu0 0.0
      %506 = vmatpush1.msra.mxu0 0.0
      %507 = vmatprep.subr.mxu0 0.0
      %508 = vmatpush1.msra.mxu0 0.0
      %509 = vmatprep.mubr.f32.mxu0 0.0
      %510 = vmatmul.mubr.f32.gmra.mrb[0].mxu0 %v398
      %v511 = vpop.f32.mrb[0].mxu0
      %v512 = vadd.f32 %v395, %v511
      %v513 = vpop.f32.mrb[0].mxu0
      %514 = vmatprep.mubr.f32.mxu0 0.0
      %515 = vmatmul.mubr.f32.gmra.mrb[0].mxu0 %v401
      %v516 = vpop.f32.mrb[0].mxu0
      %v517 = vadd.f32 %v395, %v516
      %v518 = vpop.f32.mrb[0].mxu0
      %519 = vmatprep.mubr.f32.mxu0 0.0
      %520 = vmatmul.mubr.f32.gmra.mrb[0].mxu0 %v404
      %v521 = vpop.f32.mrb[0].mxu0
      %v522 = vadd.f32 %v395, %v521
      %v523 = vpop.f32.mrb[0].mxu0
      %524 = vmatprep.mubr.f32.mxu0 0.0
      %525 = vmatmul.mubr.f32.gmra.mrb[0].mxu0 %v407
      %v526 = vpop.f32.mrb[0].mxu0
      %v527 = vadd.f32 %v395, %v526
      %v528 = vpop.f32.mrb[0].mxu0
      %529 = vmatprep.mubr.f32.mxu0 0.0
      %530 = vmatmul.mubr.f32.gmra.mrb[0].mxu0 %v410
      %v531 = vpop.f32.mrb[0].mxu0
      %v532 = vadd.f32 %v395, %v531
      %v533 = vpop.f32.mrb[0].mxu0
      %534 = vmatprep.mubr.f32.mxu0 0.0
      %535 = vmatmul.mubr.f32.gmra.mrb[0].mxu0 %v413
      %v536 = vpop.f32.mrb[0].mxu0
      %v537 = vadd.f32 %v395, %v536
      %v538 = vpop.f32.mrb[0].mxu0
      %539 = vmatprep.mubr.f32.mxu0 0.0
      %540 = vmatmul.mubr.f32.gmra.mrb[0].mxu0 %v416
      %v541 = vpop.f32.mrb[0].mxu0
      %v542 = vadd.f32 %v395, %v541
      %v543 = vpop.f32.mrb[0].mxu0
      %544 = vmatprep.mubr.f32.mxu0 0.0
      %545 = vmatmul.mubr.f32.gmra.mrb[0].mxu0 %v419
      %v546 = vpop.f32.mrb[0].mxu0
      %v547 = vadd.f32 %v395, %v546
      %v548 = vpop.f32.mrb[0].mxu0
      %549 = vmatprep.mubr.f32.mxu0 0.0
      %550 = vmatmul.mubr.f32.gmra.mrb[0].mxu0 %v422
      %v551 = vpop.f32.mrb[0].mxu0
      %v552 = vadd.f32 %v395, %v551
      %v553 = vpop.f32.mrb[0].mxu0
      %554 = vmatprep.mubr.f32.mxu0 0.0
      %555 = vmatmul.mubr.f32.gmra.mrb[0].mxu0 %v425
      %v556 = vpop.f32.mrb[0].mxu0
      %v557 = vadd.f32 %v395, %v556
      %v558 = vpop.f32.mrb[0].mxu0
      %559 = vmatprep.mubr.f32.mxu0 0.0
      %560 = vmatmul.mubr.f32.gmra.mrb[0].mxu0 %v428
      %v561 = vpop.f32.mrb[0].mxu0
      %v562 = vadd.f32 %v395, %v561
      %v563 = vpop.f32.mrb[0].mxu0
      %564 = vmatprep.mubr.f32.mxu0 0.0
      %565 = vmatmul.mubr.f32.gmra.mrb[0].mxu0 %v431
      %v566 = vpop.f32.mrb[0].mxu0
      %v567 = vadd.f32 %v395, %v566
      %v568 = vpop.f32.mrb[0].mxu0
      %569 = vmatprep.mubr.f32.mxu0 0.0
      %570 = vmatmul.mubr.f32.gmra.mrb[0].mxu0 %v434
      %v571 = vpop.f32.mrb[0].mxu0
      %v572 = vadd.f32 %v395, %v571
      %v573 = vpop.f32.mrb[0].mxu0
      %574 = vmatprep.mubr.f32.mxu0 0.0
      %575 = vmatmul.mubr.f32.gmra.mrb[0].mxu0 %v437
      %v576 = vpop.f32.mrb[0].mxu0
      %v577 = vadd.f32 %v395, %v576
      %v578 = vpop.f32.mrb[0].mxu0
      %579 = vmatprep.mubr.f32.mxu0 0.0
      %580 = vmatmul.mubr.f32.gmra.mrb[0].mxu0 %v440
      %v581 = vpop.f32.mrb[0].mxu0
      %v582 = vadd.f32 %v395, %v581
      %v583 = vpop.f32.mrb[0].mxu0
      %584 = vmatprep.mubr.f32.mxu0 0.0
      %585 = vmatmul.mubr.f32.gmra.mrb[0].mxu0 %v443
      %v586 = vpop.f32.mrb[0].mxu0
      %v587 = vadd.f32 %v395, %v586
      %v588 = vpop.f32.mrb[0].mxu0
      %589 = vdwg.mxu0
      %v590 = vsel %vm396, %v512, 0.0
      %591 = vadd.xlane.f32.xlu0 %v590
      %v592 = vpop.xlane.xlu0 %591
      %v593 = vsel %vm396, %v517, 0.0
      %594 = vadd.xlane.f32.xlu0 %v593
      %v595 = vpop.xlane.xlu0 %594
      %v596 = vsel %vm396, %v522, 0.0
      %597 = vadd.xlane.f32.xlu0 %v596
      %v598 = vpop.xlane.xlu0 %597
      %v599 = vsel %vm396, %v527, 0.0
      %600 = vadd.xlane.f32.xlu0 %v599
      %v601 = vpop.xlane.xlu0 %600
      %v602 = vsel %vm396, %v532, 0.0
      %603 = vadd.xlane.f32.xlu0 %v602
      %v604 = vpop.xlane.xlu0 %603
      %v605 = vsel %vm396, %v537, 0.0
      %606 = vadd.xlane.f32.xlu0 %v605
      %v607 = vpop.xlane.xlu0 %606
      %v608 = vsel %vm396, %v542, 0.0
      %609 = vadd.xlane.f32.xlu0 %v608
      %v610 = vpop.xlane.xlu0 %609
      %v611 = vsel %vm396, %v547, 0.0
      %612 = vadd.xlane.f32.xlu0 %v611
      %v613 = vpop.xlane.xlu0 %612
      %v614 = vsel %vm396, %v552, 0.0
      %615 = vadd.xlane.f32.xlu0 %v614
      %v616 = vpop.xlane.xlu0 %615
      %v617 = vsel %vm396, %v557, 0.0
      %618 = vadd.xlane.f32.xlu0 %v617
      %v619 = vpop.xlane.xlu0 %618
      %v620 = vsel %vm396, %v562, 0.0
      %621 = vadd.xlane.f32.xlu0 %v620
      %v622 = vpop.xlane.xlu0 %621
      %v623 = vsel %vm396, %v567, 0.0
      %624 = vadd.xlane.f32.xlu0 %v623
      %v625 = vpop.xlane.xlu0 %624
      %v626 = vsel %vm396, %v572, 0.0
      %627 = vadd.xlane.f32.xlu0 %v626
      %v628 = vpop.xlane.xlu0 %627
      %v629 = vsel %vm396, %v577, 0.0
      %630 = vadd.xlane.f32.xlu0 %v629
      %v631 = vpop.xlane.xlu0 %630
      %v632 = vsel %vm396, %v582, 0.0
      %633 = vadd.xlane.f32.xlu0 %v632
      %v634 = vpop.xlane.xlu0 %633
      %v635 = vsel %vm396, %v587, 0.0
      %636 = vadd.xlane.f32.xlu0 %v635
      %v637 = vpop.xlane.xlu0 %636
      %v638 = vrcp.pop 32.0
      %v639 = vmul.f32 %v592, %v638
      %v640 = vmul.f32 %v595, %v638
      %v641 = vmul.f32 %v598, %v638
      %v642 = vmul.f32 %v601, %v638
      %v643 = vmul.f32 %v604, %v638
      %v644 = vmul.f32 %v607, %v638
      %v645 = vmul.f32 %v610, %v638
      %v646 = vmul.f32 %v613, %v638
      %v647 = vmul.f32 %v616, %v638
      %v648 = vmul.f32 %v619, %v638
      %v649 = vmul.f32 %v622, %v638
      %v650 = vmul.f32 %v625, %v638
      %v651 = vmul.f32 %v628, %v638
      %v652 = vmul.f32 %v631, %v638
      %v653 = vmul.f32 %v634, %v638
      %v654 = vmul.f32 %v637, %v638
      %v655 = vsub.f32 %v512, %v639
      %v656 = vsub.f32 %v517, %v640
      %v657 = vsub.f32 %v522, %v641
      %v658 = vsub.f32 %v527, %v642
      %v659 = vsub.f32 %v532, %v643
      %v660 = vsub.f32 %v537, %v644
      %v661 = vsub.f32 %v542, %v645
      %v662 = vsub.f32 %v547, %v646
      %v663 = vsub.f32 %v552, %v647
      %v664 = vsub.f32 %v557, %v648
      %v665 = vsub.f32 %v562, %v649
      %v666 = vsub.f32 %v567, %v650
      %v667 = vsub.f32 %v572, %v651
      %v668 = vsub.f32 %v577, %v652
      %v669 = vsub.f32 %v582, %v653
      %v670 = vsub.f32 %v587, %v654
      %v671 = vmul.f32 %v655, %v655
      %v672 = vmul.f32 %v656, %v656
      %v673 = vmul.f32 %v657, %v657
      %v674 = vmul.f32 %v658, %v658
      %v675 = vmul.f32 %v659, %v659
      %v676 = vmul.f32 %v660, %v660
      %v677 = vmul.f32 %v661, %v661
      %v678 = vmul.f32 %v662, %v662
      %v679 = vmul.f32 %v663, %v663
      %v680 = vmul.f32 %v664, %v664
      %v681 = vmul.f32 %v665, %v665
      %v682 = vmul.f32 %v666, %v666
      %v683 = vmul.f32 %v667, %v667
      %v684 = vmul.f32 %v668, %v668
      %v685 = vmul.f32 %v669, %v669
      %v686 = vmul.f32 %v670, %v670
      %v687 = vsel %vm396, %v671, 0.0
      %688 = vadd.xlane.f32.xlu0 %v687
      %v689 = vpop.xlane.xlu0 %688
      %v690 = vsel %vm396, %v672, 0.0
      %691 = vadd.xlane.f32.xlu0 %v690
      %v692 = vpop.xlane.xlu0 %691
      %v693 = vsel %vm396, %v673, 0.0
      %694 = vadd.xlane.f32.xlu0 %v693
      %v695 = vpop.xlane.xlu0 %694
      %v696 = vsel %vm396, %v674, 0.0
      %697 = vadd.xlane.f32.xlu0 %v696
      %v698 = vpop.xlane.xlu0 %697
      %v699 = vsel %vm396, %v675, 0.0
      %700 = vadd.xlane.f32.xlu0 %v699
      %v701 = vpop.xlane.xlu0 %700
      %v702 = vsel %vm396, %v676, 0.0
      %703 = vadd.xlane.f32.xlu0 %v702
      %v704 = vpop.xlane.xlu0 %703
      %v705 = vsel %vm396, %v677, 0.0
      %706 = vadd.xlane.f32.xlu0 %v705
      %v707 = vpop.xlane.xlu0 %706
      %v708 = vsel %vm396, %v678, 0.0
      %709 = vadd.xlane.f32.xlu0 %v708
      %v710 = vpop.xlane.xlu0 %709
      %v711 = vsel %vm396, %v679, 0.0
      %712 = vadd.xlane.f32.xlu0 %v711
      %v713 = vpop.xlane.xlu0 %712
      %v714 = vsel %vm396, %v680, 0.0
      %715 = vadd.xlane.f32.xlu0 %v714
      %v716 = vpop.xlane.xlu0 %715
      %v717 = vsel %vm396, %v681, 0.0
      %718 = vadd.xlane.f32.xlu0 %v717
      %v719 = vpop.xlane.xlu0 %718
      %v720 = vsel %vm396, %v682, 0.0
      %721 = vadd.xlane.f32.xlu0 %v720
      %v722 = vpop.xlane.xlu0 %721
      %v723 = vsel %vm396, %v683, 0.0
      %724 = vadd.xlane.f32.xlu0 %v723
      %v725 = vpop.xlane.xlu0 %724
      %v726 = vsel %vm396, %v684, 0.0
      %727 = vadd.xlane.f32.xlu0 %v726
      %v728 = vpop.xlane.xlu0 %727
      %v729 = vsel %vm396, %v685, 0.0
      %730 = vadd.xlane.f32.xlu0 %v729
      %v731 = vpop.xlane.xlu0 %730
      %v732 = vsel %vm396, %v686, 0.0
      %733 = vadd.xlane.f32.xlu0 %v732
      %v734 = vpop.xlane.xlu0 %733
      %v735 = vmul.f32 %v689, %v638
      %v736 = vmul.f32 %v692, %v638
      %v737 = vmul.f32 %v695, %v638
      %v738 = vmul.f32 %v698, %v638
      %v739 = vmul.f32 %v701, %v638
      %v740 = vmul.f32 %v704, %v638
      %v741 = vmul.f32 %v707, %v638
      %v742 = vmul.f32 %v710, %v638
      %v743 = vmul.f32 %v713, %v638
      %v744 = vmul.f32 %v716, %v638
      %v745 = vmul.f32 %v719, %v638
      %v746 = vmul.f32 %v722, %v638
      %v747 = vmul.f32 %v725, %v638
      %v748 = vmul.f32 %v728, %v638
      %v749 = vmul.f32 %v731, %v638
      %v750 = vmul.f32 %v734, %v638
      %v751 = vadd.f32 %v735, 1e-05
      %v752 = vadd.f32 %v736, 1e-05
      %v753 = vadd.f32 %v737, 1e-05
      %v754 = vadd.f32 %v738, 1e-05
      %v755 = vadd.f32 %v739, 1e-05
      %v756 = vadd.f32 %v740, 1e-05
      %v757 = vadd.f32 %v741, 1e-05
      %v758 = vadd.f32 %v742, 1e-05
      %v759 = vadd.f32 %v743, 1e-05
      %v760 = vadd.f32 %v744, 1e-05
      %v761 = vadd.f32 %v745, 1e-05
      %v762 = vadd.f32 %v746, 1e-05
      %v763 = vadd.f32 %v747, 1e-05
      %v764 = vadd.f32 %v748, 1e-05
      %v765 = vadd.f32 %v749, 1e-05
      %v766 = vadd.f32 %v750, 1e-05
      %v767 = vrsqrt.pop %v751
      %v768 = vrsqrt.pop %v752
      %v769 = vrsqrt.pop %v753
      %v770 = vrsqrt.pop %v754
      %v771 = vrsqrt.pop %v755
      %v772 = vrsqrt.pop %v756
      %v773 = vrsqrt.pop %v757
      %v774 = vrsqrt.pop %v758
      %v775 = vrsqrt.pop %v759
      %v776 = vrsqrt.pop %v760
      %v777 = vrsqrt.pop %v761
      %v778 = vrsqrt.pop %v762
      %v779 = vrsqrt.pop %v763
      %v780 = vrsqrt.pop %v764
      %v781 = vrsqrt.pop %v765
      %v782 = vrsqrt.pop %v766
      %v783 = vmul.f32 %v655, %v767
      %v784 = vmul.f32 %v656, %v768
      %v785 = vmul.f32 %v657, %v769
      %v786 = vmul.f32 %v658, %v770
      %v787 = vmul.f32 %v659, %v771
      %v788 = vmul.f32 %v660, %v772
      %v789 = vmul.f32 %v661, %v773
      %v790 = vmul.f32 %v662, %v774
      %v791 = vmul.f32 %v663, %v775
      %v792 = vmul.f32 %v664, %v776
      %v793 = vmul.f32 %v665, %v777
      %v794 = vmul.f32 %v666, %v778
      %v795 = vmul.f32 %v667, %v779
      %v796 = vmul.f32 %v668, %v780
      %v797 = vmul.f32 %v669, %v781
      %v798 = vmul.f32 %v670, %v782
      %v799 = vlaneseq
      %v800 = vshrl.u32 %v799, 7
      %v801 = vsub.s32 0, %v800
      %v802 = vrot.slane %v390, %v801
      %v803 = vmul.f32 %v783, %v802
      %v804 = vmul.f32 %v784, %v802
      %v805 = vmul.f32 %v785, %v802
      %v806 = vmul.f32 %v786, %v802
      %v807 = vmul.f32 %v787, %v802
      %v808 = vmul.f32 %v788, %v802
      %v809 = vmul.f32 %v789, %v802
      %v810 = vmul.f32 %v790, %v802
      %v811 = vmul.f32 %v791, %v802
      %v812 = vmul.f32 %v792, %v802
      %v813 = vmul.f32 %v793, %v802
      %v814 = vmul.f32 %v794, %v802
      %v815 = vmul.f32 %v795, %v802
      %v816 = vmul.f32 %v796, %v802
      %v817 = vmul.f32 %v797, %v802
      %v818 = vmul.f32 %v798, %v802
      %v819 = vlaneseq
      %v820 = vshrl.u32 %v819, 7
      %v821 = vsub.s32 0, %v820
      %v822 = vrot.slane %v391, %v821
      %v823 = vadd.f32 %v803, %v822
      %v824 = vadd.f32 %v804, %v822
      %v825 = vadd.f32 %v805, %v822
      %v826 = vadd.f32 %v806, %v822
      %v827 = vadd.f32 %v807, %v822
      %v828 = vadd.f32 %v808, %v822
      %v829 = vadd.f32 %v809, %v822
      %v830 = vadd.f32 %v810, %v822
      %v831 = vadd.f32 %v811, %v822
      %v832 = vadd.f32 %v812, %v822
      %v833 = vadd.f32 %v813, %v822
      %v834 = vadd.f32 %v814, %v822
      %v835 = vadd.f32 %v815, %v822
      %v836 = vadd.f32 %v816, %v822
      %v837 = vadd.f32 %v817, %v822
      %v838 = vadd.f32 %v818, %v822
      %v839 = vmax.f32 %v823, 0.0
      %v840 = vmax.f32 %v824, 0.0
      %v841 = vmax.f32 %v825, 0.0
      %v842 = vmax.f32 %v826, 0.0
      %v843 = vmax.f32 %v827, 0.0
      %v844 = vmax.f32 %v828, 0.0
      %v845 = vmax.f32 %v829, 0.0
      %v846 = vmax.f32 %v830, 0.0
      %v847 = vmax.f32 %v831, 0.0
      %v848 = vmax.f32 %v832, 0.0
      %v849 = vmax.f32 %v833, 0.0
      %v850 = vmax.f32 %v834, 0.0
      %v851 = vmax.f32 %v835, 0.0
      %v852 = vmax.f32 %v836, 0.0
      %v853 = vmax.f32 %v837, 0.0
      %v854 = vmax.f32 %v838, 0.0
      %v855 = vld [vmem:[%s1 + $0x40] sm:$0xff]
      %v856 = vld [vmem:[%s1 + $0x48] sm:$0xff]
      %v857 = vld [vmem:[%s1 + $0x50] sm:$0xff]
      %v858 = vld [vmem:[%s1 + $0x58] sm:$0xff]
      %v859 = vld [vmem:[%s1 + $0x60] sm:$0x1]
      %v860 = vld [vmem:[%s1 + $0x61] sm:$0x1]
      %v861 = vld [vmem:[%s1 + $0x62] sm:$0x1]
      %v862 = vlaneseq
      %v863 = vshrl.u32 %v862, 7
      %v864 = vsub.s32 0, %v863
      %v865 = vrot.slane %v859, %v864
      %v867 = vsel %vm396, %v839, 0
      %v870 = vsel %vm396, %v840, 0
      %v873 = vsel %vm396, %v841, 0
      %v876 = vsel %vm396, %v842, 0
      %v879 = vsel %vm396, %v843, 0
      %v882 = vsel %vm396, %v844, 0
      %v885 = vsel %vm396, %v845, 0
      %v888 = vsel %vm396, %v846, 0
      %v891 = vsel %vm396, %v847, 0
      %v894 = vsel %vm396, %v848, 0
      %v897 = vsel %vm396, %v849, 0
      %v900 = vsel %vm396, %v850, 0
      %v903 = vsel %vm396, %v851, 0
      %v906 = vsel %vm396, %v852, 0
      %v909 = vsel %vm396, %v853, 0
      %v912 = vsel %vm396, %v854, 0
      %914 = vmatprep.subr.mxu0 0.0
      %915 = vmatpush1.msra.mxu0 %v855
      %916 = vmatprep.subr.mxu0 0.0
      %917 = vmatpush1.msra.mxu0 %v856
      %918 = vmatprep.subr.mxu0 0.0
      %919 = vmatpush1.msra.mxu0 %v857
      %920 = vmatprep.subr.mxu0 0.0
      %921 = vmatpush1.msra.mxu0 %v858
      %922 = vmatprep.subr.mxu0 0.0
      %923 = vmatpush1.msra.mxu0 0.0
      %924 = vmatprep.subr.mxu0 0.0
      %925 = vmatpush1.msra.mxu0 0.0
      %926 = vmatprep.subr.mxu0 0.0
      %927 = vmatpush1.msra.mxu0 0.0
      %928 = vmatprep.subr.mxu0 0.0
      %929 = vmatpush1.msra.mxu0 0.0
      %930 = vmatprep.subr.mxu0 0.0
      %931 = vmatpush1.msra.mxu0 0.0
      %932 = vmatprep.subr.mxu0 0.0
      %933 = vmatpush1.msra.mxu0 0.0
      %934 = vmatprep.subr.mxu0 0.0
      %935 = vmatpush1.msra.mxu0 0.0
      %936 = vmatprep.subr.mxu0 0.0
      %937 = vmatpush1.msra.mxu0 0.0
      %938 = vmatprep.subr.mxu0 0.0
      %939 = vmatpush1.msra.mxu0 0.0
      %940 = vmatprep.subr.mxu0 0.0
      %941 = vmatpush1.msra.mxu0 0.0
      %942 = vmatprep.subr.mxu0 0.0
      %943 = vmatpush1.msra.mxu0 0.0
      %944 = vmatprep.subr.mxu0 0.0
      %945 = vmatpush1.msra.mxu0 0.0
      %946 = vmatprep.subr.mxu0 0.0
      %947 = vmatpush1.msra.mxu0 0.0
      %948 = vmatprep.subr.mxu0 0.0
      %949 = vmatpush1.msra.mxu0 0.0
      %950 = vmatprep.subr.mxu0 0.0
      %951 = vmatpush1.msra.mxu0 0.0
      %952 = vmatprep.subr.mxu0 0.0
      %953 = vmatpush1.msra.mxu0 0.0
      %954 = vmatprep.subr.mxu0 0.0
      %955 = vmatpush1.msra.mxu0 0.0
      %956 = vmatprep.subr.mxu0 0.0
      %957 = vmatpush1.msra.mxu0 0.0
      %958 = vmatprep.subr.mxu0 0.0
      %959 = vmatpush1.msra.mxu0 0.0
      %960 = vmatprep.subr.mxu0 0.0
      %961 = vmatpush1.msra.mxu0 0.0
      %962 = vmatprep.subr.mxu0 0.0
      %963 = vmatpush1.msra.mxu0 0.0
      %964 = vmatprep.subr.mxu0 0.0
      %965 = vmatpush1.msra.mxu0 0.0
      %966 = vmatprep.subr.mxu0 0.0
      %967 = vmatpush1.msra.mxu0 0.0
      %968 = vmatprep.subr.mxu0 0.0
      %969 = vmatpush1.msra.mxu0 0.0
      %970 = vmatprep.subr.mxu0 0.0
      %971 = vmatpush1.msra.mxu0 0.0
      %972 = vmatprep.subr.mxu0 0.0
      %973 = vmatpush1.msra.mxu0 0.0
      %974 = vmatprep.subr.mxu0 0.0
      %975 = vmatpush1.msra.mxu0 0.0
      %976 = vmatprep.subr.mxu0 0.0
      %977 = vmatpush1.msra.mxu0 0.0
      %978 = vmatprep.mubr.f32.mxu0 0.0
      %979 = vmatmul.mubr.f32.gmra.mrb[0].mxu0 %v867
      %v980 = vpop.f32.mrb[0].mxu0
      %v981 = vadd.f32 %v865, %v980
      %v982 = vpop.f32.mrb[0].mxu0
      %983 = vmatprep.mubr.f32.mxu0 0.0
      %984 = vmatmul.mubr.f32.gmra.mrb[0].mxu0 %v870
      %v985 = vpop.f32.mrb[0].mxu0
      %v986 = vadd.f32 %v865, %v985
      %v987 = vpop.f32.mrb[0].mxu0
      %988 = vmatprep.mubr.f32.mxu0 0.0
      %989 = vmatmul.mubr.f32.gmra.mrb[0].mxu0 %v873
      %v990 = vpop.f32.mrb[0].mxu0
      %v991 = vadd.f32 %v865, %v990
      %v992 = vpop.f32.mrb[0].mxu0
      %993 = vmatprep.mubr.f32.mxu0 0.0
      %994 = vmatmul.mubr.f32.gmra.mrb[0].mxu0 %v876
      %v995 = vpop.f32.mrb[0].mxu0
      %v996 = vadd.f32 %v865, %v995
      %v997 = vpop.f32.mrb[0].mxu0
      %998 = vmatprep.mubr.f32.mxu0 0.0
      %999 = vmatmul.mubr.f32.gmra.mrb[0].mxu0 %v879
      %v1000 = vpop.f32.mrb[0].mxu0
      %v1001 = vadd.f32 %v865, %v1000
      %v1002 = vpop.f32.mrb[0].mxu0
      %1003 = vmatprep.mubr.f32.mxu0 0.0
      %1004 = vmatmul.mubr.f32.gmra.mrb[0].mxu0 %v882
      %v1005 = vpop.f32.mrb[0].mxu0
      %v1006 = vadd.f32 %v865, %v1005
      %v1007 = vpop.f32.mrb[0].mxu0
      %1008 = vmatprep.mubr.f32.mxu0 0.0
      %1009 = vmatmul.mubr.f32.gmra.mrb[0].mxu0 %v885
      %v1010 = vpop.f32.mrb[0].mxu0
      %v1011 = vadd.f32 %v865, %v1010
      %v1012 = vpop.f32.mrb[0].mxu0
      %1013 = vmatprep.mubr.f32.mxu0 0.0
      %1014 = vmatmul.mubr.f32.gmra.mrb[0].mxu0 %v888
      %v1015 = vpop.f32.mrb[0].mxu0
      %v1016 = vadd.f32 %v865, %v1015
      %v1017 = vpop.f32.mrb[0].mxu0
      %1018 = vmatprep.mubr.f32.mxu0 0.0
      %1019 = vmatmul.mubr.f32.gmra.mrb[0].mxu0 %v891
      %v1020 = vpop.f32.mrb[0].mxu0
      %v1021 = vadd.f32 %v865, %v1020
      %v1022 = vpop.f32.mrb[0].mxu0
      %1023 = vmatprep.mubr.f32.mxu0 0.0
      %1024 = vmatmul.mubr.f32.gmra.mrb[0].mxu0 %v894
      %v1025 = vpop.f32.mrb[0].mxu0
      %v1026 = vadd.f32 %v865, %v1025
      %v1027 = vpop.f32.mrb[0].mxu0
      %1028 = vmatprep.mubr.f32.mxu0 0.0
      %1029 = vmatmul.mubr.f32.gmra.mrb[0].mxu0 %v897
      %v1030 = vpop.f32.mrb[0].mxu0
      %v1031 = vadd.f32 %v865, %v1030
      %v1032 = vpop.f32.mrb[0].mxu0
      %1033 = vmatprep.mubr.f32.mxu0 0.0
      %1034 = vmatmul.mubr.f32.gmra.mrb[0].mxu0 %v900
      %v1035 = vpop.f32.mrb[0].mxu0
      %v1036 = vadd.f32 %v865, %v1035
      %v1037 = vpop.f32.mrb[0].mxu0
      %1038 = vmatprep.mubr.f32.mxu0 0.0
      %1039 = vmatmul.mubr.f32.gmra.mrb[0].mxu0 %v903
      %v1040 = vpop.f32.mrb[0].mxu0
      %v1041 = vadd.f32 %v865, %v1040
      %v1042 = vpop.f32.mrb[0].mxu0
      %1043 = vmatprep.mubr.f32.mxu0 0.0
      %1044 = vmatmul.mubr.f32.gmra.mrb[0].mxu0 %v906
      %v1045 = vpop.f32.mrb[0].mxu0
      %v1046 = vadd.f32 %v865, %v1045
      %v1047 = vpop.f32.mrb[0].mxu0
      %1048 = vmatprep.mubr.f32.mxu0 0.0
      %1049 = vmatmul.mubr.f32.gmra.mrb[0].mxu0 %v909
      %v1050 = vpop.f32.mrb[0].mxu0
      %v1051 = vadd.f32 %v865, %v1050
      %v1052 = vpop.f32.mrb[0].mxu0
      %1053 = vmatprep.mubr.f32.mxu0 0.0
      %1054 = vmatmul.mubr.f32.gmra.mrb[0].mxu0 %v912
      %v1055 = vpop.f32.mrb[0].mxu0
      %v1056 = vadd.f32 %v865, %v1055
      %v1057 = vpop.f32.mrb[0].mxu0
      %1058 = vdwg.mxu0
      %v1059 = vsel %vm396, %v981, 0.0
      %1060 = vadd.xlane.f32.xlu0 %v1059
      %v1061 = vpop.xlane.xlu0 %1060
      %v1062 = vsel %vm396, %v986, 0.0
      %1063 = vadd.xlane.f32.xlu0 %v1062
      %v1064 = vpop.xlane.xlu0 %1063
      %v1065 = vsel %vm396, %v991, 0.0
      %1066 = vadd.xlane.f32.xlu0 %v1065
      %v1067 = vpop.xlane.xlu0 %1066
      %v1068 = vsel %vm396, %v996, 0.0
      %1069 = vadd.xlane.f32.xlu0 %v1068
      %v1070 = vpop.xlane.xlu0 %1069
      %v1071 = vsel %vm396, %v1001, 0.0
      %1072 = vadd.xlane.f32.xlu0 %v1071
      %v1073 = vpop.xlane.xlu0 %1072
      %v1074 = vsel %vm396, %v1006, 0.0
      %1075 = vadd.xlane.f32.xlu0 %v1074
      %v1076 = vpop.xlane.xlu0 %1075
      %v1077 = vsel %vm396, %v1011, 0.0
      %1078 = vadd.xlane.f32.xlu0 %v1077
      %v1079 = vpop.xlane.xlu0 %1078
      %v1080 = vsel %vm396, %v1016, 0.0
      %1081 = vadd.xlane.f32.xlu0 %v1080
      %v1082 = vpop.xlane.xlu0 %1081
      %v1083 = vsel %vm396, %v1021, 0.0
      %1084 = vadd.xlane.f32.xlu0 %v1083
      %v1085 = vpop.xlane.xlu0 %1084
      %v1086 = vsel %vm396, %v1026, 0.0
      %1087 = vadd.xlane.f32.xlu0 %v1086
      %v1088 = vpop.xlane.xlu0 %1087
      %v1089 = vsel %vm396, %v1031, 0.0
      %1090 = vadd.xlane.f32.xlu0 %v1089
      %v1091 = vpop.xlane.xlu0 %1090
      %v1092 = vsel %vm396, %v1036, 0.0
      %1093 = vadd.xlane.f32.xlu0 %v1092
      %v1094 = vpop.xlane.xlu0 %1093
      %v1095 = vsel %vm396, %v1041, 0.0
      %1096 = vadd.xlane.f32.xlu0 %v1095
      %v1097 = vpop.xlane.xlu0 %1096
      %v1098 = vsel %vm396, %v1046, 0.0
      %1099 = vadd.xlane.f32.xlu0 %v1098
      %v1100 = vpop.xlane.xlu0 %1099
      %v1101 = vsel %vm396, %v1051, 0.0
      %1102 = vadd.xlane.f32.xlu0 %v1101
      %v1103 = vpop.xlane.xlu0 %1102
      %v1104 = vsel %vm396, %v1056, 0.0
      %1105 = vadd.xlane.f32.xlu0 %v1104
      %v1106 = vpop.xlane.xlu0 %1105
      %v1107 = vmul.f32 %v1061, %v638
      %v1108 = vmul.f32 %v1064, %v638
      %v1109 = vmul.f32 %v1067, %v638
      %v1110 = vmul.f32 %v1070, %v638
      %v1111 = vmul.f32 %v1073, %v638
      %v1112 = vmul.f32 %v1076, %v638
      %v1113 = vmul.f32 %v1079, %v638
      %v1114 = vmul.f32 %v1082, %v638
      %v1115 = vmul.f32 %v1085, %v638
      %v1116 = vmul.f32 %v1088, %v638
      %v1117 = vmul.f32 %v1091, %v638
      %v1118 = vmul.f32 %v1094, %v638
      %v1119 = vmul.f32 %v1097, %v638
      %v1120 = vmul.f32 %v1100, %v638
      %v1121 = vmul.f32 %v1103, %v638
      %v1122 = vmul.f32 %v1106, %v638
      %v1123 = vsub.f32 %v981, %v1107
      %v1124 = vsub.f32 %v986, %v1108
      %v1125 = vsub.f32 %v991, %v1109
      %v1126 = vsub.f32 %v996, %v1110
      %v1127 = vsub.f32 %v1001, %v1111
      %v1128 = vsub.f32 %v1006, %v1112
      %v1129 = vsub.f32 %v1011, %v1113
      %v1130 = vsub.f32 %v1016, %v1114
      %v1131 = vsub.f32 %v1021, %v1115
      %v1132 = vsub.f32 %v1026, %v1116
      %v1133 = vsub.f32 %v1031, %v1117
      %v1134 = vsub.f32 %v1036, %v1118
      %v1135 = vsub.f32 %v1041, %v1119
      %v1136 = vsub.f32 %v1046, %v1120
      %v1137 = vsub.f32 %v1051, %v1121
      %v1138 = vsub.f32 %v1056, %v1122
      %v1139 = vmul.f32 %v1123, %v1123
      %v1140 = vmul.f32 %v1124, %v1124
      %v1141 = vmul.f32 %v1125, %v1125
      %v1142 = vmul.f32 %v1126, %v1126
      %v1143 = vmul.f32 %v1127, %v1127
      %v1144 = vmul.f32 %v1128, %v1128
      %v1145 = vmul.f32 %v1129, %v1129
      %v1146 = vmul.f32 %v1130, %v1130
      %v1147 = vmul.f32 %v1131, %v1131
      %v1148 = vmul.f32 %v1132, %v1132
      %v1149 = vmul.f32 %v1133, %v1133
      %v1150 = vmul.f32 %v1134, %v1134
      %v1151 = vmul.f32 %v1135, %v1135
      %v1152 = vmul.f32 %v1136, %v1136
      %v1153 = vmul.f32 %v1137, %v1137
      %v1154 = vmul.f32 %v1138, %v1138
      %v1155 = vsel %vm396, %v1139, 0.0
      %1156 = vadd.xlane.f32.xlu0 %v1155
      %v1157 = vpop.xlane.xlu0 %1156
      %v1158 = vsel %vm396, %v1140, 0.0
      %1159 = vadd.xlane.f32.xlu0 %v1158
      %v1160 = vpop.xlane.xlu0 %1159
      %v1161 = vsel %vm396, %v1141, 0.0
      %1162 = vadd.xlane.f32.xlu0 %v1161
      %v1163 = vpop.xlane.xlu0 %1162
      %v1164 = vsel %vm396, %v1142, 0.0
      %1165 = vadd.xlane.f32.xlu0 %v1164
      %v1166 = vpop.xlane.xlu0 %1165
      %v1167 = vsel %vm396, %v1143, 0.0
      %1168 = vadd.xlane.f32.xlu0 %v1167
      %v1169 = vpop.xlane.xlu0 %1168
      %v1170 = vsel %vm396, %v1144, 0.0
      %1171 = vadd.xlane.f32.xlu0 %v1170
      %v1172 = vpop.xlane.xlu0 %1171
      %v1173 = vsel %vm396, %v1145, 0.0
      %1174 = vadd.xlane.f32.xlu0 %v1173
      %v1175 = vpop.xlane.xlu0 %1174
      %v1176 = vsel %vm396, %v1146, 0.0
      %1177 = vadd.xlane.f32.xlu0 %v1176
      %v1178 = vpop.xlane.xlu0 %1177
      %v1179 = vsel %vm396, %v1147, 0.0
      %1180 = vadd.xlane.f32.xlu0 %v1179
      %v1181 = vpop.xlane.xlu0 %1180
      %v1182 = vsel %vm396, %v1148, 0.0
      %1183 = vadd.xlane.f32.xlu0 %v1182
      %v1184 = vpop.xlane.xlu0 %1183
      %v1185 = vsel %vm396, %v1149, 0.0
      %1186 = vadd.xlane.f32.xlu0 %v1185
      %v1187 = vpop.xlane.xlu0 %1186
      %v1188 = vsel %vm396, %v1150, 0.0
      %1189 = vadd.xlane.f32.xlu0 %v1188
      %v1190 = vpop.xlane.xlu0 %1189
      %v1191 = vsel %vm396, %v1151, 0.0
      %1192 = vadd.xlane.f32.xlu0 %v1191
      %v1193 = vpop.xlane.xlu0 %1192
      %v1194 = vsel %vm396, %v1152, 0.0
      %1195 = vadd.xlane.f32.xlu0 %v1194
      %v1196 = vpop.xlane.xlu0 %1195
      %v1197 = vsel %vm396, %v1153, 0.0
      %1198 = vadd.xlane.f32.xlu0 %v1197
      %v1199 = vpop.xlane.xlu0 %1198
      %v1200 = vsel %vm396, %v1154, 0.0
      %1201 = vadd.xlane.f32.xlu0 %v1200
      %v1202 = vpop.xlane.xlu0 %1201
      %v1203 = vmul.f32 %v1157, %v638
      %v1204 = vmul.f32 %v1160, %v638
      %v1205 = vmul.f32 %v1163, %v638
      %v1206 = vmul.f32 %v1166, %v638
      %v1207 = vmul.f32 %v1169, %v638
      %v1208 = vmul.f32 %v1172, %v638
      %v1209 = vmul.f32 %v1175, %v638
      %v1210 = vmul.f32 %v1178, %v638
      %v1211 = vmul.f32 %v1181, %v638
      %v1212 = vmul.f32 %v1184, %v638
      %v1213 = vmul.f32 %v1187, %v638
      %v1214 = vmul.f32 %v1190, %v638
      %v1215 = vmul.f32 %v1193, %v638
      %v1216 = vmul.f32 %v1196, %v638
      %v1217 = vmul.f32 %v1199, %v638
      %v1218 = vmul.f32 %v1202, %v638
      %v1219 = vadd.f32 %v1203, 1e-05
      %v1220 = vadd.f32 %v1204, 1e-05
      %v1221 = vadd.f32 %v1205, 1e-05
      %v1222 = vadd.f32 %v1206, 1e-05
      %v1223 = vadd.f32 %v1207, 1e-05
      %v1224 = vadd.f32 %v1208, 1e-05
      %v1225 = vadd.f32 %v1209, 1e-05
      %v1226 = vadd.f32 %v1210, 1e-05
      %v1227 = vadd.f32 %v1211, 1e-05
      %v1228 = vadd.f32 %v1212, 1e-05
      %v1229 = vadd.f32 %v1213, 1e-05
      %v1230 = vadd.f32 %v1214, 1e-05
      %v1231 = vadd.f32 %v1215, 1e-05
      %v1232 = vadd.f32 %v1216, 1e-05
      %v1233 = vadd.f32 %v1217, 1e-05
      %v1234 = vadd.f32 %v1218, 1e-05
      %v1235 = vrsqrt.pop %v1219
      %v1236 = vrsqrt.pop %v1220
      %v1237 = vrsqrt.pop %v1221
      %v1238 = vrsqrt.pop %v1222
      %v1239 = vrsqrt.pop %v1223
      %v1240 = vrsqrt.pop %v1224
      %v1241 = vrsqrt.pop %v1225
      %v1242 = vrsqrt.pop %v1226
      %v1243 = vrsqrt.pop %v1227
      %v1244 = vrsqrt.pop %v1228
      %v1245 = vrsqrt.pop %v1229
      %v1246 = vrsqrt.pop %v1230
      %v1247 = vrsqrt.pop %v1231
      %v1248 = vrsqrt.pop %v1232
      %v1249 = vrsqrt.pop %v1233
      %v1250 = vrsqrt.pop %v1234
      %v1251 = vmul.f32 %v1123, %v1235
      %v1252 = vmul.f32 %v1124, %v1236
      %v1253 = vmul.f32 %v1125, %v1237
      %v1254 = vmul.f32 %v1126, %v1238
      %v1255 = vmul.f32 %v1127, %v1239
      %v1256 = vmul.f32 %v1128, %v1240
      %v1257 = vmul.f32 %v1129, %v1241
      %v1258 = vmul.f32 %v1130, %v1242
      %v1259 = vmul.f32 %v1131, %v1243
      %v1260 = vmul.f32 %v1132, %v1244
      %v1261 = vmul.f32 %v1133, %v1245
      %v1262 = vmul.f32 %v1134, %v1246
      %v1263 = vmul.f32 %v1135, %v1247
      %v1264 = vmul.f32 %v1136, %v1248
      %v1265 = vmul.f32 %v1137, %v1249
      %v1266 = vmul.f32 %v1138, %v1250
      %v1267 = vlaneseq
      %v1268 = vshrl.u32 %v1267, 7
      %v1269 = vsub.s32 0, %v1268
      %v1270 = vrot.slane %v860, %v1269
      %v1271 = vmul.f32 %v1251, %v1270
      %v1272 = vmul.f32 %v1252, %v1270
      %v1273 = vmul.f32 %v1253, %v1270
      %v1274 = vmul.f32 %v1254, %v1270
      %v1275 = vmul.f32 %v1255, %v1270
      %v1276 = vmul.f32 %v1256, %v1270
      %v1277 = vmul.f32 %v1257, %v1270
      %v1278 = vmul.f32 %v1258, %v1270
      %v1279 = vmul.f32 %v1259, %v1270
      %v1280 = vmul.f32 %v1260, %v1270
      %v1281 = vmul.f32 %v1261, %v1270
      %v1282 = vmul.f32 %v1262, %v1270
      %v1283 = vmul.f32 %v1263, %v1270
      %v1284 = vmul.f32 %v1264, %v1270
      %v1285 = vmul.f32 %v1265, %v1270
      %v1286 = vmul.f32 %v1266, %v1270
      %v1287 = vlaneseq
      %v1288 = vshrl.u32 %v1287, 7
      %v1289 = vsub.s32 0, %v1288
      %v1290 = vrot.slane %v861, %v1289
      %v1291 = vadd.f32 %v1271, %v1290
      %v1292 = vadd.f32 %v1272, %v1290
      %v1293 = vadd.f32 %v1273, %v1290
      %v1294 = vadd.f32 %v1274, %v1290
      %v1295 = vadd.f32 %v1275, %v1290
      %v1296 = vadd.f32 %v1276, %v1290
      %v1297 = vadd.f32 %v1277, %v1290
      %v1298 = vadd.f32 %v1278, %v1290
      %v1299 = vadd.f32 %v1279, %v1290
      %v1300 = vadd.f32 %v1280, %v1290
      %v1301 = vadd.f32 %v1281, %v1290
      %v1302 = vadd.f32 %v1282, %v1290
      %v1303 = vadd.f32 %v1283, %v1290
      %v1304 = vadd.f32 %v1284, %v1290
      %v1305 = vadd.f32 %v1285, %v1290
      %v1306 = vadd.f32 %v1286, %v1290
      %v1307 = vmax.f32 %v1291, 0.0
      %v1308 = vmax.f32 %v1292, 0.0
      %v1309 = vmax.f32 %v1293, 0.0
      %v1310 = vmax.f32 %v1294, 0.0
      %v1311 = vmax.f32 %v1295, 0.0
      %v1312 = vmax.f32 %v1296, 0.0
      %v1313 = vmax.f32 %v1297, 0.0
      %v1314 = vmax.f32 %v1298, 0.0
      %v1315 = vmax.f32 %v1299, 0.0
      %v1316 = vmax.f32 %v1300, 0.0
      %v1317 = vmax.f32 %v1301, 0.0
      %v1318 = vmax.f32 %v1302, 0.0
      %v1319 = vmax.f32 %v1303, 0.0
      %v1320 = vmax.f32 %v1304, 0.0
      %v1321 = vmax.f32 %v1305, 0.0
      %v1322 = vmax.f32 %v1306, 0.0
      %v1323 = vld [vmem:[%s1 + $0x68] sm:$0xff]
      %v1324 = vld [vmem:[%s1 + $0x70] sm:$0xff]
      %v1325 = vld [vmem:[%s1 + $0x78] sm:$0xff]
      %v1326 = vld [vmem:[%s1 + $0x80] sm:$0xff]
      %v1327 = vld [vmem:[%s1 + $0x88] sm:$0xff]
      %v1328 = vld [vmem:[%s1 + $0x90] sm:$0xff]
      %v1329 = vld [vmem:[%s1 + $0x98] sm:$0x7f]
      %v1330 = vld [vmem:[%s1 + $0x9f] sm:$0x1]
      %1331 = vrot.lane.b32.xlu0 %v147, 32
      %v1332 = vpop.permute.xlu0 %1331
      %1333 = vrot.lane.b32.xlu0 %v148, 32
      %v1334 = vpop.permute.xlu0 %1333
      %1335 = vrot.lane.b32.xlu0 %v149, 32
      %v1336 = vpop.permute.xlu0 %1335
      %1337 = vrot.lane.b32.xlu0 %v150, 32
      %v1338 = vpop.permute.xlu0 %1337
      %1339 = vrot.lane.b32.xlu0 %v151, 32
      %v1340 = vpop.permute.xlu0 %1339
      %1341 = vrot.lane.b32.xlu0 %v152, 32
      %v1342 = vpop.permute.xlu0 %1341
      %1343 = vrot.lane.b32.xlu0 %v153, 32
      %v1344 = vpop.permute.xlu0 %1343
      %1345 = vrot.lane.b32.xlu0 %v154, 32
      %v1346 = vpop.permute.xlu0 %1345
      %1347 = vrot.lane.b32.xlu0 %v155, 32
      %v1348 = vpop.permute.xlu0 %1347
      %1349 = vrot.lane.b32.xlu0 %v156, 32
      %v1350 = vpop.permute.xlu0 %1349
      %1351 = vrot.lane.b32.xlu0 %v157, 32
      %v1352 = vpop.permute.xlu0 %1351
      %1353 = vrot.lane.b32.xlu0 %v158, 32
      %v1354 = vpop.permute.xlu0 %1353
      %1355 = vrot.lane.b32.xlu0 %v159, 32
      %v1356 = vpop.permute.xlu0 %1355
      %1357 = vrot.lane.b32.xlu0 %v160, 32
      %v1358 = vpop.permute.xlu0 %1357
      %1359 = vrot.lane.b32.xlu0 %v161, 32
      %v1360 = vpop.permute.xlu0 %1359
      %1361 = vrot.lane.b32.xlu0 %v162, 32
      %v1362 = vpop.permute.xlu0 %1361
      %v1379 = vsel %vm396, %v1307, %v1332
      %v1380 = vsel %vm396, %v1308, %v1334
      %v1381 = vsel %vm396, %v1309, %v1336
      %v1382 = vsel %vm396, %v1310, %v1338
      %v1383 = vsel %vm396, %v1311, %v1340
      %v1384 = vsel %vm396, %v1312, %v1342
      %v1385 = vsel %vm396, %v1313, %v1344
      %v1386 = vsel %vm396, %v1314, %v1346
      %v1387 = vsel %vm396, %v1315, %v1348
      %v1388 = vsel %vm396, %v1316, %v1350
      %v1389 = vsel %vm396, %v1317, %v1352
      %v1390 = vsel %vm396, %v1318, %v1354
      %v1391 = vsel %vm396, %v1319, %v1356
      %v1392 = vsel %vm396, %v1320, %v1358
      %v1393 = vsel %vm396, %v1321, %v1360
      %v1394 = vsel %vm396, %v1322, %v1362
      %v1395 = vlaneseq
      %v1396 = vshrl.u32 %v1395, 7
      %v1397 = vsub.s32 0, %v1396
      %v1398 = vrot.slane %v1330, %v1397
      %vm1399 = vcmask 449536
      %v1401 = vsel %vm1399, %v1379, 0
      %v1404 = vsel %vm1399, %v1380, 0
      %v1407 = vsel %vm1399, %v1381, 0
      %v1410 = vsel %vm1399, %v1382, 0
      %v1413 = vsel %vm1399, %v1383, 0
      %v1416 = vsel %vm1399, %v1384, 0
      %v1419 = vsel %vm1399, %v1385, 0
      %v1422 = vsel %vm1399, %v1386, 0
      %v1425 = vsel %vm1399, %v1387, 0
      %v1428 = vsel %vm1399, %v1388, 0
      %v1431 = vsel %vm1399, %v1389, 0
      %v1434 = vsel %vm1399, %v1390, 0
      %v1437 = vsel %vm1399, %v1391, 0
      %v1440 = vsel %vm1399, %v1392, 0
      %v1443 = vsel %vm1399, %v1393, 0
      %v1446 = vsel %vm1399, %v1394, 0
      %v1449 = vsel %vm220, %v1329, 0
      %1451 = vmatprep.subr.mxu0 0.0
      %1452 = vmatpush1.msra.mxu0 %v1323
      %1453 = vmatprep.subr.mxu0 0.0
      %1454 = vmatpush1.msra.mxu0 %v1324
      %1455 = vmatprep.subr.mxu0 0.0
      %1456 = vmatpush1.msra.mxu0 %v1325
      %1457 = vmatprep.subr.mxu0 0.0
      %1458 = vmatpush1.msra.mxu0 %v1326
      %1459 = vmatprep.subr.mxu0 0.0
      %1460 = vmatpush1.msra.mxu0 %v1327
      %1461 = vmatprep.subr.mxu0 0.0
      %1462 = vmatpush1.msra.mxu0 %v1328
      %1463 = vmatprep.subr.mxu0 0.0
      %1464 = vmatpush1.msra.mxu0 %v1449
      %1465 = vmatprep.subr.mxu0 0.0
      %1466 = vmatpush1.msra.mxu0 0.0
      %1467 = vmatprep.subr.mxu0 0.0
      %1468 = vmatpush1.msra.mxu0 0.0
      %1469 = vmatprep.subr.mxu0 0.0
      %1470 = vmatpush1.msra.mxu0 0.0
      %1471 = vmatprep.subr.mxu0 0.0
      %1472 = vmatpush1.msra.mxu0 0.0
      %1473 = vmatprep.subr.mxu0 0.0
      %1474 = vmatpush1.msra.mxu0 0.0
      %1475 = vmatprep.subr.mxu0 0.0
      %1476 = vmatpush1.msra.mxu0 0.0
      %1477 = vmatprep.subr.mxu0 0.0
      %1478 = vmatpush1.msra.mxu0 0.0
      %1479 = vmatprep.subr.mxu0 0.0
      %1480 = vmatpush1.msra.mxu0 0.0
      %1481 = vmatprep.subr.mxu0 0.0
      %1482 = vmatpush1.msra.mxu0 0.0
      %1483 = vmatprep.subr.mxu0 0.0
      %1484 = vmatpush1.msra.mxu0 0.0
      %1485 = vmatprep.subr.mxu0 0.0
      %1486 = vmatpush1.msra.mxu0 0.0
      %1487 = vmatprep.subr.mxu0 0.0
      %1488 = vmatpush1.msra.mxu0 0.0
      %1489 = vmatprep.subr.mxu0 0.0
      %1490 = vmatpush1.msra.mxu0 0.0
      %1491 = vmatprep.subr.mxu0 0.0
      %1492 = vmatpush1.msra.mxu0 0.0
      %1493 = vmatprep.subr.mxu0 0.0
      %1494 = vmatpush1.msra.mxu0 0.0
      %1495 = vmatprep.subr.mxu0 0.0
      %1496 = vmatpush1.msra.mxu0 0.0
      %1497 = vmatprep.subr.mxu0 0.0
      %1498 = vmatpush1.msra.mxu0 0.0
      %1499 = vmatprep.subr.mxu0 0.0
      %1500 = vmatpush1.msra.mxu0 0.0
      %1501 = vmatprep.subr.mxu0 0.0
      %1502 = vmatpush1.msra.mxu0 0.0
      %1503 = vmatprep.subr.mxu0 0.0
      %1504 = vmatpush1.msra.mxu0 0.0
      %1505 = vmatprep.subr.mxu0 0.0
      %1506 = vmatpush1.msra.mxu0 0.0
      %1507 = vmatprep.subr.mxu0 0.0
      %1508 = vmatpush1.msra.mxu0 0.0
      %1509 = vmatprep.subr.mxu0 0.0
      %1510 = vmatpush1.msra.mxu0 0.0
      %1511 = vmatprep.subr.mxu0 0.0
      %1512 = vmatpush1.msra.mxu0 0.0
      %1513 = vmatprep.subr.mxu0 0.0
      %1514 = vmatpush1.msra.mxu0 0.0
      %1515 = vmatprep.mubr.f32.mxu0 0.0
      %1516 = vmatmul.mubr.f32.gmra.mrb[0].mxu0 %v1401
      %v1517 = vpop.f32.mrb[0].mxu0
      %v1518 = vadd.f32 %v1398, %v1517
      %v1519 = vpop.f32.mrb[0].mxu0
      %1520 = vmatprep.mubr.f32.mxu0 0.0
      %1521 = vmatmul.mubr.f32.gmra.mrb[0].mxu0 %v1404
      %v1522 = vpop.f32.mrb[0].mxu0
      %v1523 = vadd.f32 %v1398, %v1522
      %v1524 = vpop.f32.mrb[0].mxu0
      %1525 = vmatprep.mubr.f32.mxu0 0.0
      %1526 = vmatmul.mubr.f32.gmra.mrb[0].mxu0 %v1407
      %v1527 = vpop.f32.mrb[0].mxu0
      %v1528 = vadd.f32 %v1398, %v1527
      %v1529 = vpop.f32.mrb[0].mxu0
      %1530 = vmatprep.mubr.f32.mxu0 0.0
      %1531 = vmatmul.mubr.f32.gmra.mrb[0].mxu0 %v1410
      %v1532 = vpop.f32.mrb[0].mxu0
      %v1533 = vadd.f32 %v1398, %v1532
      %v1534 = vpop.f32.mrb[0].mxu0
      %1535 = vmatprep.mubr.f32.mxu0 0.0
      %1536 = vmatmul.mubr.f32.gmra.mrb[0].mxu0 %v1413
      %v1537 = vpop.f32.mrb[0].mxu0
      %v1538 = vadd.f32 %v1398, %v1537
      %v1539 = vpop.f32.mrb[0].mxu0
      %1540 = vmatprep.mubr.f32.mxu0 0.0
      %1541 = vmatmul.mubr.f32.gmra.mrb[0].mxu0 %v1416
      %v1542 = vpop.f32.mrb[0].mxu0
      %v1543 = vadd.f32 %v1398, %v1542
      %v1544 = vpop.f32.mrb[0].mxu0
      %1545 = vmatprep.mubr.f32.mxu0 0.0
      %1546 = vmatmul.mubr.f32.gmra.mrb[0].mxu0 %v1419
      %v1547 = vpop.f32.mrb[0].mxu0
      %v1548 = vadd.f32 %v1398, %v1547
      %v1549 = vpop.f32.mrb[0].mxu0
      %1550 = vmatprep.mubr.f32.mxu0 0.0
      %1551 = vmatmul.mubr.f32.gmra.mrb[0].mxu0 %v1422
      %v1552 = vpop.f32.mrb[0].mxu0
      %v1553 = vadd.f32 %v1398, %v1552
      %v1554 = vpop.f32.mrb[0].mxu0
      %1555 = vmatprep.mubr.f32.mxu0 0.0
      %1556 = vmatmul.mubr.f32.gmra.mrb[0].mxu0 %v1425
      %v1557 = vpop.f32.mrb[0].mxu0
      %v1558 = vadd.f32 %v1398, %v1557
      %v1559 = vpop.f32.mrb[0].mxu0
      %1560 = vmatprep.mubr.f32.mxu0 0.0
      %1561 = vmatmul.mubr.f32.gmra.mrb[0].mxu0 %v1428
      %v1562 = vpop.f32.mrb[0].mxu0
      %v1563 = vadd.f32 %v1398, %v1562
      %v1564 = vpop.f32.mrb[0].mxu0
      %1565 = vmatprep.mubr.f32.mxu0 0.0
      %1566 = vmatmul.mubr.f32.gmra.mrb[0].mxu0 %v1431
      %v1567 = vpop.f32.mrb[0].mxu0
      %v1568 = vadd.f32 %v1398, %v1567
      %v1569 = vpop.f32.mrb[0].mxu0
      %1570 = vmatprep.mubr.f32.mxu0 0.0
      %1571 = vmatmul.mubr.f32.gmra.mrb[0].mxu0 %v1434
      %v1572 = vpop.f32.mrb[0].mxu0
      %v1573 = vadd.f32 %v1398, %v1572
      %v1574 = vpop.f32.mrb[0].mxu0
      %1575 = vmatprep.mubr.f32.mxu0 0.0
      %1576 = vmatmul.mubr.f32.gmra.mrb[0].mxu0 %v1437
      %v1577 = vpop.f32.mrb[0].mxu0
      %v1578 = vadd.f32 %v1398, %v1577
      %v1579 = vpop.f32.mrb[0].mxu0
      %1580 = vmatprep.mubr.f32.mxu0 0.0
      %1581 = vmatmul.mubr.f32.gmra.mrb[0].mxu0 %v1440
      %v1582 = vpop.f32.mrb[0].mxu0
      %v1583 = vadd.f32 %v1398, %v1582
      %v1584 = vpop.f32.mrb[0].mxu0
      %1585 = vmatprep.mubr.f32.mxu0 0.0
      %1586 = vmatmul.mubr.f32.gmra.mrb[0].mxu0 %v1443
      %v1587 = vpop.f32.mrb[0].mxu0
      %v1588 = vadd.f32 %v1398, %v1587
      %v1589 = vpop.f32.mrb[0].mxu0
      %1590 = vmatprep.mubr.f32.mxu0 0.0
      %1591 = vmatmul.mubr.f32.gmra.mrb[0].mxu0 %v1446
      %v1592 = vpop.f32.mrb[0].mxu0
      %v1593 = vadd.f32 %v1398, %v1592
      %v1594 = vpop.f32.mrb[0].mxu0
      %1595 = vdwg.mxu0
      %1596 = vadd.xlane.f32.xlu0 %v1518
      %v1597 = vpop.xlane.xlu0 %1596
      %1598 = vadd.xlane.f32.xlu0 %v1523
      %v1599 = vpop.xlane.xlu0 %1598
      %1600 = vadd.xlane.f32.xlu0 %v1528
      %v1601 = vpop.xlane.xlu0 %1600
      %1602 = vadd.xlane.f32.xlu0 %v1533
      %v1603 = vpop.xlane.xlu0 %1602
      %1604 = vadd.xlane.f32.xlu0 %v1538
      %v1605 = vpop.xlane.xlu0 %1604
      %1606 = vadd.xlane.f32.xlu0 %v1543
      %v1607 = vpop.xlane.xlu0 %1606
      %1608 = vadd.xlane.f32.xlu0 %v1548
      %v1609 = vpop.xlane.xlu0 %1608
      %1610 = vadd.xlane.f32.xlu0 %v1553
      %v1611 = vpop.xlane.xlu0 %1610
      %1612 = vadd.xlane.f32.xlu0 %v1558
      %v1613 = vpop.xlane.xlu0 %1612
      %1614 = vadd.xlane.f32.xlu0 %v1563
      %v1615 = vpop.xlane.xlu0 %1614
      %1616 = vadd.xlane.f32.xlu0 %v1568
      %v1617 = vpop.xlane.xlu0 %1616
      %1618 = vadd.xlane.f32.xlu0 %v1573
      %v1619 = vpop.xlane.xlu0 %1618
      %1620 = vadd.xlane.f32.xlu0 %v1578
      %v1621 = vpop.xlane.xlu0 %1620
      %1622 = vadd.xlane.f32.xlu0 %v1583
      %v1623 = vpop.xlane.xlu0 %1622
      %1624 = vadd.xlane.f32.xlu0 %v1588
      %v1625 = vpop.xlane.xlu0 %1624
      %1626 = vadd.xlane.f32.xlu0 %v1593
      %v1627 = vpop.xlane.xlu0 %1626
      %v1628 = vsub.f32 %v1597, %v1518
      %v1629 = vsub.f32 %v1599, %v1523
      %v1630 = vsub.f32 %v1601, %v1528
      %v1631 = vsub.f32 %v1603, %v1533
      %v1632 = vsub.f32 %v1605, %v1538
      %v1633 = vsub.f32 %v1607, %v1543
      %v1634 = vsub.f32 %v1609, %v1548
      %v1635 = vsub.f32 %v1611, %v1553
      %v1636 = vsub.f32 %v1613, %v1558
      %v1637 = vsub.f32 %v1615, %v1563
      %v1638 = vsub.f32 %v1617, %v1568
      %v1639 = vsub.f32 %v1619, %v1573
      %v1640 = vsub.f32 %v1621, %v1578
      %v1641 = vsub.f32 %v1623, %v1583
      %v1642 = vsub.f32 %v1625, %v1588
      %v1643 = vsub.f32 %v1627, %v1593
      %v1644 = vmul.f32 %v1628, 0.16666667
      %v1645 = vmul.f32 %v1629, 0.16666667
      %v1646 = vmul.f32 %v1630, 0.16666667
      %v1647 = vmul.f32 %v1631, 0.16666667
      %v1648 = vmul.f32 %v1632, 0.16666667
      %v1649 = vmul.f32 %v1633, 0.16666667
      %v1650 = vmul.f32 %v1634, 0.16666667
      %v1651 = vmul.f32 %v1635, 0.16666667
      %v1652 = vmul.f32 %v1636, 0.16666667
      %v1653 = vmul.f32 %v1637, 0.16666667
      %v1654 = vmul.f32 %v1638, 0.16666667
      %v1655 = vmul.f32 %v1639, 0.16666667
      %v1656 = vmul.f32 %v1640, 0.16666667
      %v1657 = vmul.f32 %v1641, 0.16666667
      %v1658 = vmul.f32 %v1642, 0.16666667
      %v1659 = vmul.f32 %v1643, 0.16666667
      %v1660 = vsub.f32 %v1518, %v1644
      %v1661 = vsub.f32 %v1523, %v1645
      %v1662 = vsub.f32 %v1528, %v1646
      %v1663 = vsub.f32 %v1533, %v1647
      %v1664 = vsub.f32 %v1538, %v1648
      %v1665 = vsub.f32 %v1543, %v1649
      %v1666 = vsub.f32 %v1548, %v1650
      %v1667 = vsub.f32 %v1553, %v1651
      %v1668 = vsub.f32 %v1558, %v1652
      %v1669 = vsub.f32 %v1563, %v1653
      %v1670 = vsub.f32 %v1568, %v1654
      %v1671 = vsub.f32 %v1573, %v1655
      %v1672 = vsub.f32 %v1578, %v1656
      %v1673 = vsub.f32 %v1583, %v1657
      %v1674 = vsub.f32 %v1588, %v1658
      %v1675 = vsub.f32 %v1593, %v1659
      %1677 = vset.pattern.permute.xlu0 6
      %1678 = vperm.xlu0 %1677, %v1660
      %v1679 = vpop.permute.xlu0 %1678
      %1682 = vset.pattern.permute.xlu0 6
      %1683 = vperm.xlu0 %1682, %v1661
      %v1684 = vpop.permute.xlu0 %1683
      %1687 = vset.pattern.permute.xlu0 6
      %1688 = vperm.xlu0 %1687, %v1662
      %v1689 = vpop.permute.xlu0 %1688
      %1692 = vset.pattern.permute.xlu0 6
      %1693 = vperm.xlu0 %1692, %v1663
      %v1694 = vpop.permute.xlu0 %1693
      %1697 = vset.pattern.permute.xlu0 6
      %1698 = vperm.xlu0 %1697, %v1664
      %v1699 = vpop.permute.xlu0 %1698
      %1702 = vset.pattern.permute.xlu0 6
      %1703 = vperm.xlu0 %1702, %v1665
      %v1704 = vpop.permute.xlu0 %1703
      %1707 = vset.pattern.permute.xlu0 6
      %1708 = vperm.xlu0 %1707, %v1666
      %v1709 = vpop.permute.xlu0 %1708
      %1712 = vset.pattern.permute.xlu0 6
      %1713 = vperm.xlu0 %1712, %v1667
      %v1714 = vpop.permute.xlu0 %1713
      %1717 = vset.pattern.permute.xlu0 6
      %1718 = vperm.xlu0 %1717, %v1668
      %v1719 = vpop.permute.xlu0 %1718
      %1722 = vset.pattern.permute.xlu0 6
      %1723 = vperm.xlu0 %1722, %v1669
      %v1724 = vpop.permute.xlu0 %1723
      %1727 = vset.pattern.permute.xlu0 6
      %1728 = vperm.xlu0 %1727, %v1670
      %v1729 = vpop.permute.xlu0 %1728
      %1732 = vset.pattern.permute.xlu0 6
      %1733 = vperm.xlu0 %1732, %v1671
      %v1734 = vpop.permute.xlu0 %1733
      %1737 = vset.pattern.permute.xlu0 6
      %1738 = vperm.xlu0 %1737, %v1672
      %v1739 = vpop.permute.xlu0 %1738
      %1742 = vset.pattern.permute.xlu0 6
      %1743 = vperm.xlu0 %1742, %v1673
      %v1744 = vpop.permute.xlu0 %1743
      %1747 = vset.pattern.permute.xlu0 6
      %1748 = vperm.xlu0 %1747, %v1674
      %v1749 = vpop.permute.xlu0 %1748
      %1752 = vset.pattern.permute.xlu0 6
      %1753 = vperm.xlu0 %1752, %v1675
      %v1754 = vpop.permute.xlu0 %1753
      %v1756 = vadd.f32 %v1518, %v1679
      %v1757 = vadd.f32 %v1523, %v1684
      %v1758 = vadd.f32 %v1528, %v1689
      %v1759 = vadd.f32 %v1533, %v1694
      %v1760 = vadd.f32 %v1538, %v1699
      %v1761 = vadd.f32 %v1543, %v1704
      %v1762 = vadd.f32 %v1548, %v1709
      %v1763 = vadd.f32 %v1553, %v1714
      %v1764 = vadd.f32 %v1558, %v1719
      %v1765 = vadd.f32 %v1563, %v1724
      %v1766 = vadd.f32 %v1568, %v1729
      %v1767 = vadd.f32 %v1573, %v1734
      %v1768 = vadd.f32 %v1578, %v1739
      %v1769 = vadd.f32 %v1583, %v1744
      %v1770 = vadd.f32 %v1588, %v1749
      %v1771 = vadd.f32 %v1593, %v1754
      %1772 = vst [vmem:[%s145] sm:$0xff] %v1756
      %1773 = vst [vmem:[%s145 + $0x8] sm:$0xff] %v1757
      %1774 = vst [vmem:[%s145 + $0x10] sm:$0xff] %v1758
      %1775 = vst [vmem:[%s145 + $0x18] sm:$0xff] %v1759
      %1776 = vst [vmem:[%s145 + $0x20] sm:$0xff] %v1760
      %1777 = vst [vmem:[%s145 + $0x28] sm:$0xff] %v1761
      %1778 = vst [vmem:[%s145 + $0x30] sm:$0xff] %v1762
      %1779 = vst [vmem:[%s145 + $0x38] sm:$0xff] %v1763
      %1780 = vst [vmem:[%s145 + $0x40] sm:$0xff] %v1764
      %1781 = vst [vmem:[%s145 + $0x48] sm:$0xff] %v1765
      %1782 = vst [vmem:[%s145 + $0x50] sm:$0xff] %v1766
      %1783 = vst [vmem:[%s145 + $0x58] sm:$0xff] %v1767
      %1784 = vst [vmem:[%s145 + $0x60] sm:$0xff] %v1768
      %1785 = vst [vmem:[%s145 + $0x68] sm:$0xff] %v1769
      %1786 = vst [vmem:[%s145 + $0x70] sm:$0xff] %v1770
      %1787 = vst [vmem:[%s145 + $0x78] sm:$0xff] %v1771
      %s1788 = smul.u32 16, %s13
      %p1789 = scmp.lt.s32.totalorder %s1788, 31
      %s1790 = scalar_select %p1789, %s1788, 31
      %s1791 = smul.addr %s1790, 8
      %s1792 = scalar_lea.vmem %s2, %s1791
      // Predicated region
      $region29: #{policy_net_dqn_forward.1} parent=27 // pred_check
        %p1793 = pneg %p78
      $region30: #{policy_net_dqn_forward.1} parent=27 // pred_check_branch
        %1795 = sbr.rel (%p1793) target = $region32
      $region31: #{policy_net_dqn_forward.1} parent=27 // pred_region
        %s1796 = smul.u32 16, %s13
      $region32: #{policy_net_dqn_forward.1} parent=27 // pred_fallthru
        _
    $region28: #{policy_net_dqn_forward.1} parent=5 // pred_fallthru
      _
    %p1797 = scmp.le.s32.totalorder 2, %s8
    // Predicated region
    $region33: #{policy_net_dqn_forward.1} parent=5 // pred_check
      %p1798 = pneg %p1797
    $region34: #{policy_net_dqn_forward.1} parent=5 // pred_check_branch
      %1800 = sbr.rel (%p1798) target = $region36
    $region35: #{policy_net_dqn_forward.1} parent=5 // pred_region
      %s1801 = ssub.s32 %s8, 2
      // Predicated region
      $region37: #{policy_net_dqn_forward.1} parent=35 // pred_check
        %p1802 = pneg %p84
      $region38: #{policy_net_dqn_forward.1} parent=35 // pred_check_branch
        %1804 = sbr.rel (%p1802) target = $region40
      $region39: #{policy_net_dqn_forward.1} parent=35 // pred_region
        %s1805 = smul.u32 16, %s14
        %p1806 = scmp.lt.s32.totalorder %s1805, 31
        %s1807 = scalar_select %p1806, %s1805, 31
        %s1808 = smul.addr %s1807, 8
        %s1809 = scalar_lea.vmem %s2, %s1808
      $region40: #{policy_net_dqn_forward.1} parent=35 // pred_fallthru
        _
    $region36: #{policy_net_dqn_forward.1} parent=5 // pred_fallthru
      _
  $region6: #{policy_net_dqn_forward.1} parent=0 // loop_footer
    %s12 = sadd.s32 1, %s8
  $region7: #{policy_net_dqn_forward.1} parent=0 // loop_footer_branch
    %7 = sbr.rel target = $region3
  $region8: #{policy_net_dqn_forward.1} parent=0 // loop_exit
    _

</llo_original>
